<compile_context>
chip_gen: v7x
topology: tpu7x:2x2x1
jax: 0.10.0
libtpu: 0.0.40
codegen_flags: <defaults>
</compile_context>

<pallas_src>
import jax
import jax.numpy as jnp
from jax import lax
from jax.experimental import pallas as pl
from jax.experimental.pallas import tpu as pltpu

H = 32           # hidden size
NLAYERS = 2
USER_MAX_LEN = 50
ITEM_MAX_LEN = 50

_VMEM_LIMIT = 48 * 1024 * 1024   # safe on v5e/v6e (128 MiB) and v7x (64 MiB)


def _round_up(x, m):
    return (x + m - 1) // m * m


def _full_spec(shape):
    """Whole-array (grid-invariant) block for small resident operands."""
    return pl.BlockSpec(shape, lambda *_: (0,) * len(shape))


# ------------------------ fused per-node-type reduce ------------------------

def _reduce_kernel(nbr_ref, dst_ref, rank_ref, time_ref,
                   w_nbr_ref, w_dst_ref, demb_tab_ref, dembk_tab_ref,
                   w_agg_ref, w_upd_ref, o_ref):
    """DSGRLayers {user,recipe}_reduce + agg_gate + update, fused, one row tile.

    nbr:      [T, D, H]  RAW neighbor (source) features (pre linear transform)
    dst:      [T, H]     RAW destination features (pre-layer, used for update)
    rank:     [T, D]     time rank (0 = most recent), int32
    time:     [T, D]     edge times, f32
    w_nbr:    [H, H]     linear transform for the neighbor node type ([in,out])
    w_dst:    [H, H]     linear transform for the destination node type
    demb_tab: [Dmax, H]  date_emb table
    dembk_tab:[Dmax, H]  date_emb_k table
    w_agg:    [2H, H]    agg_gate weight ([in,out])
    w_upd:    [2H, H]    update weight ([in,out])
    """
    tn, d, h = nbr_ref.shape
    scale = 1.0 / jnp.sqrt(jnp.float32(h))

    nbr_raw = nbr_ref[...]
    dst = dst_ref[...]
    rank = rank_ref[...]
    t = time_ref[...]

    # ---- in-kernel linear transforms (MXU; K = N = 32, essentially free) ----
    nbr2d = jnp.dot(nbr_raw.reshape(tn * d, h), w_nbr_ref[...],
                    preferred_element_type=jnp.float32)            # [T*D, H]
    nbr = nbr2d.reshape(tn, d, h)
    # 1/sqrt(H) folded into the attention query (dst_w only feeds e).
    dst_w = jnp.dot(dst, w_dst_ref[...],
                    preferred_element_type=jnp.float32) * scale    # [T, H]

    # ---- in-kernel date-embedding gather via one-hot matmul (MXU) ----
    dmax = demb_tab_ref.shape[0]
    iota_rank = lax.broadcasted_iota(jnp.int32, (tn, d, dmax), 2)
    onehot_r = (rank[:, :, None] == iota_rank).astype(jnp.float32)  # [T, D, Dmax]
    oh2 = onehot_r.reshape(tn * d, dmax)
    demb = jnp.dot(oh2, demb_tab_ref[...],
                   preferred_element_type=jnp.float32).reshape(tn, d, h)
    dembk = jnp.dot(oh2, dembk_tab_ref[...],
                    preferred_element_type=jnp.float32).reshape(tn, d, h)

    # ---- long-term attention ----
    # TODO(synk): the axis=2 dot-reductions could be offloaded to the MXU via a
    # ones[H,1] matmul to unload the XLU; kept as lane reductions for robustness.
    e = jnp.sum((demb + nbr) * dst_w[:, None, :], axis=2)           # [T, D]
    e = e - jnp.max(e, axis=1, keepdims=True)
    p = jnp.exp(e)
    alpha = p * pl.reciprocal(jnp.sum(p, axis=1, keepdims=True), approx=True)
    h_long = jnp.sum(alpha[:, :, None] * (nbr + dembk), axis=1)     # [T, H]

    # ---- short-term attention against the (first) most recent neighbor ----
    tmax = jnp.max(t, axis=1, keepdims=True)
    iota_d = lax.broadcasted_iota(jnp.int32, (tn, d), 1)
    first_idx = jnp.min(jnp.where(t == tmax, iota_d, d), axis=1, keepdims=True)
    onehot = (iota_d == first_idx).astype(jnp.float32)              # [T, D]
    last_emb = jnp.sum(onehot[:, :, None] * nbr, axis=1) * scale    # [T, H]
    e1 = jnp.sum(last_emb[:, None, :] * nbr, axis=2)                # [T, D]
    e1 = e1 - jnp.max(e1, axis=1, keepdims=True)
    p1 = jnp.exp(e1)
    alpha1 = p1 * pl.reciprocal(jnp.sum(p1, axis=1, keepdims=True), approx=True)
    h_short = jnp.sum(alpha1[:, :, None] * nbr, axis=1)             # [T, H]

    # ---- agg_gate(cat([h_long, h_short])) without an in-kernel concat ----
    agg = (jnp.dot(h_long, w_agg_ref[:h, :], preferred_element_type=jnp.float32)
           + jnp.dot(h_short, w_agg_ref[h:, :], preferred_element_type=jnp.float32))

    # ---- tanh(update(cat([agg, dst_orig]))) ----
    o_ref[...] = jnp.tanh(
        jnp.dot(agg, w_upd_ref[:h, :], preferred_element_type=jnp.float32)
        + jnp.dot(dst, w_upd_ref[h:, :], preferred_element_type=jnp.float32))


def pallas_reduce_fused(nbr_raw, dst, rank, time_f, w_nbr, w_dst,
                        demb_tab, dembk_tab, w_agg, w_upd, *, tile_n=256):
    """Row-tiled fused reduce.  Handles ragged N by zero-padding (sliced off)."""
    n, d, h = nbr_raw.shape
    tile = min(tile_n, _round_up(n, 8))           # tile multiple of 8 (sublanes)
    n_pad = _round_up(n, tile)
    if n_pad != n:
        pad = n_pad - n
        nbr_raw = jnp.pad(nbr_raw, ((0, pad), (0, 0), (0, 0)))
        dst = jnp.pad(dst, ((0, pad), (0, 0)))
        rank = jnp.pad(rank, ((0, pad), (0, 0)))
        time_f = jnp.pad(time_f, ((0, pad), (0, 0)))

    out = pl.pallas_call(
        _reduce_kernel,
        out_shape=jax.ShapeDtypeStruct((n_pad, h), jnp.float32),
        grid=(n_pad // tile,),
        in_specs=[
            pl.BlockSpec((tile, d, h), lambda i: (i, 0, 0)),   # nbr (streamed)
            pl.BlockSpec((tile, h), lambda i: (i, 0)),         # dst (streamed)
            pl.BlockSpec((tile, d), lambda i: (i, 0)),         # rank
            pl.BlockSpec((tile, d), lambda i: (i, 0)),         # time
            _full_spec(w_nbr.shape),                           # resident weights
            _full_spec(w_dst.shape),
            _full_spec(demb_tab.shape),
            _full_spec(dembk_tab.shape),
            _full_spec(w_agg.shape),
            _full_spec(w_upd.shape),
        ],
        out_specs=pl.BlockSpec((tile, h), lambda i: (i, 0)),
        compiler_params=pltpu.CompilerParams(
            dimension_semantics=("parallel",),
            vmem_limit_bytes=_VMEM_LIMIT),
    )(nbr_raw, dst, rank, time_f, w_nbr, w_dst, demb_tab, dembk_tab,
      w_agg, w_upd)
    return out[:n]


# ------------------------------ score kernel ------------------------------

def _score_kernel(u_ref, emb_ref, o_ref):
    # score_tile[b, r] = <unified[b], recipe_emb[r]>  (contract over H)
    o_ref[...] = lax.dot_general(
        u_ref[...], emb_ref[...], (((1,), (1,)), ((), ())),
        preferred_element_type=jnp.float32)


def pallas_score(unified, recipe_emb, *, tile_r=512):
    """unified [B,H] x recipe_emb [R,H] -> [B,R], tiled over R (lane-dense)."""
    b, h = unified.shape
    r = recipe_emb.shape[0]
    tile = min(tile_r, _round_up(r, 128))          # output lanes multiple of 128
    r_pad = _round_up(r, tile)
    emb = jnp.pad(recipe_emb, ((0, r_pad - r), (0, 0))) if r_pad != r else recipe_emb

    out = pl.pallas_call(
        _score_kernel,
        out_shape=jax.ShapeDtypeStruct((b, r_pad), jnp.float32),
        grid=(r_pad // tile,),
        in_specs=[pl.BlockSpec((b, h), lambda i: (0, 0)),
                  pl.BlockSpec((tile, h), lambda i: (i, 0))],
        out_specs=pl.BlockSpec((b, tile), lambda i: (0, i)),
        compiler_params=pltpu.CompilerParams(
            dimension_semantics=("parallel",),
            vmem_limit_bytes=_VMEM_LIMIT),
    )(unified, emb)
    return out[:, :r]


# ------------------------------ model glue ------------------------------

def init_params(key, n_users, n_recipes, hidden, nlayers):
    def nxt():
        nonlocal key
        key, sub = jax.random.split(key)
        return sub

    def rnd(shape):
        return jax.random.normal(nxt(), shape, jnp.float32) * 0.1

    params = {
        "user_emb": rnd((n_users, hidden)),
        "recipe_emb": rnd((n_recipes, hidden)),
        # all linear weights stored as [in, out] (transposed vs nn.Linear)
        "unified_map": rnd((nlayers * hidden, hidden)),
        "layers": [],
    }
    for _ in range(nlayers):
        params["layers"].append({
            "user_weight": rnd((hidden, hidden)),
            "recipe_weight": rnd((hidden, hidden)),
            "agg_gate_user": rnd((2 * hidden, hidden)),
            "agg_gate_recipe": rnd((2 * hidden, hidden)),
            "user_update": rnd((2 * hidden, hidden)),
            "recipe_update": rnd((2 * hidden, hidden)),
            "user_date_emb": rnd((ITEM_MAX_LEN, hidden)),
            "user_date_emb_k": rnd((ITEM_MAX_LEN, hidden)),
            "recipe_date_emb": rnd((USER_MAX_LEN, hidden)),
            "recipe_date_emb_k": rnd((USER_MAX_LEN, hidden)),
        })
    return params


def dsgr_forward(params, user_ids, item_ids, user_nbr_items, user_nbr_time,
                 item_nbr_users, item_nbr_time, batch_num_users, user_index,
                 neg_tar):
    user = params["user_emb"][user_ids]                   # [NU, H]
    item = params["recipe_emb"][item_ids]                 # [NI, H]

    offsets = jnp.roll(jnp.cumsum(batch_num_users), 1).at[0].set(0)
    new_user_index = offsets + user_index                 # [B]

    # time ranks are layer-invariant -> hoisted out of the layer loop
    du = user_nbr_items.shape[1]
    di = item_nbr_users.shape[1]
    rank_u = (du - jnp.argsort(jnp.argsort(user_nbr_time, axis=1), axis=1)
              - 1).astype(jnp.int32)
    rank_i = (di - jnp.argsort(jnp.argsort(item_nbr_time, axis=1), axis=1)
              - 1).astype(jnp.int32)
    time_u = user_nbr_time.astype(jnp.float32)
    time_i = item_nbr_time.astype(jnp.float32)

    user_layer = []
    for lp in params["layers"]:
        # Raw row gathers stay in XLA glue; the linear transforms of both the
        # mailbox and the destination happen inside the Pallas kernel.
        # TODO(synk): replace these XLA gathers with in-kernel DMA gather
        #             (scalar-prefetched neighbor indices) to avoid the raw
        #             [N,D,H] mailbox round-trip through HBM.
        item_mail = item[user_nbr_items]                  # [NU, Du, H]
        user_mail = user[item_nbr_users]                  # [NI, Di, H]

        # 'by' edges: item -> user (user_reduce)
        new_user = pallas_reduce_fused(
            item_mail, user, rank_u, time_u,
            lp["recipe_weight"], lp["user_weight"],
            lp["user_date_emb"], lp["user_date_emb_k"],
            lp["agg_gate_user"], lp["user_update"])
        # 'pby' edges: user -> item (recipe_reduce)
        new_item = pallas_reduce_fused(
            user_mail, item, rank_i, time_i,
            lp["user_weight"], lp["recipe_weight"],
            lp["recipe_date_emb"], lp["recipe_date_emb_k"],
            lp["agg_gate_recipe"], lp["recipe_update"])

        user, item = new_user, new_item
        user_layer.append(user[new_user_index])           # [B, H]

    # Tiny epilogue ops stay in plain XLA (sub-vreg sized; pallas_call overhead
    # would dominate).
    unified = jnp.concatenate(user_layer, axis=-1) @ params["unified_map"]  # [B, H]

    score = pallas_score(unified, params["recipe_emb"])   # [B, n_recipes]

    neg_emb = params["recipe_emb"][neg_tar]               # [B, Nneg, H]
    neg_score = jnp.einsum("bh,bkh->bk", unified, neg_emb)
    return score, neg_score


# ----------------------------- demo -----------------------------

if __name__ == "__main__":
    n_users, n_recipes = 20, 24
    B = 2                     # number of batched graphs
    NU_PER, NI_PER = 8, 8
    NU, NI = B * NU_PER, B * NI_PER
    DU, DI = 8, 8             # uniform in-degree per node type
    NNEG = 8

    root = jax.random.PRNGKey(0)
    kp, k1, k2, k3, k4, k5, k6, k7, k8 = jax.random.split(root, 9)

    params = init_params(kp, n_users, n_recipes, H, NLAYERS)

    user_ids = jax.random.randint(k1, (NU,), 0, n_users)
    item_ids = jax.random.randint(k2, (NI,), 0, n_recipes)
    user_nbr_items = jax.random.randint(k3, (NU, DU), 0, NI)
    item_nbr_users = jax.random.randint(k4, (NI, DI), 0, NU)
    # unique per-row times (permutations) so argmax / argsort are well defined
    user_nbr_time = jnp.argsort(jax.random.uniform(k5, (NU, DU)), axis=1)
    item_nbr_time = jnp.argsort(jax.random.uniform(k6, (NI, DI)), axis=1)
    batch_num_users = jnp.array([NU_PER] * B, jnp.int32)
    user_index = jax.random.randint(k7, (B,), 0, NU_PER)
    neg_tar = jax.random.randint(k8, (B, NNEG), 0, n_recipes)

    score, neg_score = dsgr_forward(
        params, user_ids, item_ids, user_nbr_items, user_nbr_time,
        item_nbr_users, item_nbr_time, batch_num_users, user_index, neg_tar)
    jax.block_until_ready((score, neg_score))

    assert score.shape == (B, n_recipes)
    assert neg_score.shape == (B, NNEG)
    assert jnp.all(jnp.isfinite(score)) and jnp.all(jnp.isfinite(neg_score))
    print("KERNEL_OK")
</pallas_src>

<mosaic_0001>
module attributes {stable_mosaic.version = 11 : i64} {
  func.func @_reduce_kernel(%arg0: i32, %arg1: memref<16x8x32xf32, #tpu.memory_space<vmem>>, %arg2: memref<16x32xf32, #tpu.memory_space<vmem>>, %arg3: memref<16x8xi32, #tpu.memory_space<vmem>>, %arg4: memref<16x8xf32, #tpu.memory_space<vmem>>, %arg5: memref<32x32xf32, #tpu.memory_space<vmem>>, %arg6: memref<32x32xf32, #tpu.memory_space<vmem>>, %arg7: memref<50x32xf32, #tpu.memory_space<vmem>>, %arg8: memref<50x32xf32, #tpu.memory_space<vmem>>, %arg9: memref<64x32xf32, #tpu.memory_space<vmem>>, %arg10: memref<64x32xf32, #tpu.memory_space<vmem>>, %arg11: memref<16x32xf32, #tpu.memory_space<vmem>>) attributes {dimension_semantics = [#tpu.dimension_semantics<parallel>], iteration_bounds = array<i64: 1>, scalar_prefetch = 0 : i64, scratch_operands = 0 : i64, tpu.core_type = #tpu.core_type<tc>, window_params = [{transform_indices = @transform_0, window_bounds = array<i64: 16, 8, 32>}, {transform_indices = @transform_1, window_bounds = array<i64: 16, 32>}, {transform_indices = @transform_2, window_bounds = array<i64: 16, 8>}, {transform_indices = @transform_3, window_bounds = array<i64: 16, 8>}, {pipeline_mode = #tpu.pipeline_mode<synchronous>, transform_indices = @transform_4, window_bounds = array<i64: 32, 32>}, {pipeline_mode = #tpu.pipeline_mode<synchronous>, transform_indices = @transform_5, window_bounds = array<i64: 32, 32>}, {pipeline_mode = #tpu.pipeline_mode<synchronous>, transform_indices = @transform_6, window_bounds = array<i64: 50, 32>}, {pipeline_mode = #tpu.pipeline_mode<synchronous>, transform_indices = @transform_7, window_bounds = array<i64: 50, 32>}, {pipeline_mode = #tpu.pipeline_mode<synchronous>, transform_indices = @transform_8, window_bounds = array<i64: 64, 32>}, {pipeline_mode = #tpu.pipeline_mode<synchronous>, transform_indices = @transform_9, window_bounds = array<i64: 64, 32>}, {transform_indices = @transform_10, window_bounds = array<i64: 16, 32>}]} {
    %cst = arith.constant 3.200000e+01 : f32
    %0 = math.sqrt %cst : f32
    %cst_0 = arith.constant 1.000000e+00 : f32
    %1 = arith.divf %cst_0, %0 : f32
    %c0 = arith.constant 0 : index
    %c0_1 = arith.constant 0 : index
    %c0_2 = arith.constant 0 : index
    %2 = vector.load %arg1[%c0, %c0_1, %c0_2] : memref<16x8x32xf32, #tpu.memory_space<vmem>>, vector<16x8x32xf32>
    %c0_3 = arith.constant 0 : index
    %c0_4 = arith.constant 0 : index
    %3 = vector.load %arg2[%c0_3, %c0_4] : memref<16x32xf32, #tpu.memory_space<vmem>>, vector<16x32xf32>
    %c0_5 = arith.constant 0 : index
    %c0_6 = arith.constant 0 : index
    %4 = vector.load %arg3[%c0_5, %c0_6] : memref<16x8xi32, #tpu.memory_space<vmem>>, vector<16x8xi32>
    %c0_7 = arith.constant 0 : index
    %c0_8 = arith.constant 0 : index
    %5 = vector.load %arg4[%c0_7, %c0_8] : memref<16x8xf32, #tpu.memory_space<vmem>>, vector<16x8xf32>
    %6 = vector.shape_cast %2 : vector<16x8x32xf32> to vector<128x32xf32>
    %c0_9 = arith.constant 0 : index
    %c0_10 = arith.constant 0 : index
    %7 = vector.load %arg5[%c0_9, %c0_10] : memref<32x32xf32, #tpu.memory_space<vmem>>, vector<32x32xf32>
    %cst_11 = arith.constant dense<0.000000e+00> : vector<128x32xf32>
    %8 = tpu.matmul %6, %7, %cst_11 {dimension_numbers = #tpu.dot_dimension_numbers<[1], [0], [0], [1], [0, 0, 1, 1], [], []>} : vector<128x32xf32>, vector<32x32xf32>, vector<128x32xf32> -> vector<128x32xf32>
    %9 = vector.shape_cast %8 : vector<128x32xf32> to vector<16x8x32xf32>
    %c0_12 = arith.constant 0 : index
    %c0_13 = arith.constant 0 : index
    %10 = vector.load %arg6[%c0_12, %c0_13] : memref<32x32xf32, #tpu.memory_space<vmem>>, vector<32x32xf32>
    %cst_14 = arith.constant dense<0.000000e+00> : vector<16x32xf32>
    %11 = tpu.matmul %3, %10, %cst_14 {dimension_numbers = #tpu.dot_dimension_numbers<[1], [0], [0], [1], [0, 0, 1, 1], [], []>} : vector<16x32xf32>, vector<32x32xf32>, vector<16x32xf32> -> vector<16x32xf32>
    %12 = vector.broadcast %1 : f32 to vector<16x32xf32>
    %13 = arith.mulf %11, %12 : vector<16x32xf32>
    %14 = tpu.iota {dimensions = array<i32: 2>} : vector<16x8x50xi32>
    %15 = vector.shape_cast %4 : vector<16x8xi32> to vector<16x8x1xi32>
    %16 = vector.broadcast %15 : vector<16x8x1xi32> to vector<16x8x50xi32>
    %17 = arith.cmpi eq, %16, %14 : vector<16x8x50xi32>
    %18 = arith.extui %17 : vector<16x8x50xi1> to vector<16x8x50xi32>
    %19 = arith.sitofp %18 : vector<16x8x50xi32> to vector<16x8x50xf32>
    %20 = vector.shape_cast %19 : vector<16x8x50xf32> to vector<128x50xf32>
    %c0_15 = arith.constant 0 : index
    %c0_16 = arith.constant 0 : index
    %21 = vector.load %arg7[%c0_15, %c0_16] : memref<50x32xf32, #tpu.memory_space<vmem>>, vector<50x32xf32>
    %cst_17 = arith.constant dense<0.000000e+00> : vector<128x32xf32>
    %22 = tpu.matmul %20, %21, %cst_17 {dimension_numbers = #tpu.dot_dimension_numbers<[1], [0], [0], [1], [0, 0, 1, 1], [], []>} : vector<128x50xf32>, vector<50x32xf32>, vector<128x32xf32> -> vector<128x32xf32>
    %23 = vector.shape_cast %22 : vector<128x32xf32> to vector<16x8x32xf32>
    %c0_18 = arith.constant 0 : index
    %c0_19 = arith.constant 0 : index
    %24 = vector.load %arg8[%c0_18, %c0_19] : memref<50x32xf32, #tpu.memory_space<vmem>>, vector<50x32xf32>
    %cst_20 = arith.constant dense<0.000000e+00> : vector<128x32xf32>
    %25 = tpu.matmul %20, %24, %cst_20 {dimension_numbers = #tpu.dot_dimension_numbers<[1], [0], [0], [1], [0, 0, 1, 1], [], []>} : vector<128x50xf32>, vector<50x32xf32>, vector<128x32xf32> -> vector<128x32xf32>
    %26 = vector.shape_cast %25 : vector<128x32xf32> to vector<16x8x32xf32>
    %27 = arith.addf %23, %9 : vector<16x8x32xf32>
    %28 = vector.shape_cast %13 : vector<16x32xf32> to vector<16x1x32xf32>
    %29 = vector.broadcast %28 : vector<16x1x32xf32> to vector<16x8x32xf32>
    %30 = arith.mulf %27, %29 : vector<16x8x32xf32>
    %cst_21 = arith.constant dense<0.000000e+00> : vector<16x8xf32>
    %31 = vector.multi_reduction <add>, %30, %cst_21 [2] : vector<16x8x32xf32> to vector<16x8xf32>
    %cst_22 = arith.constant dense<0xFF800000> : vector<16xf32>
    %32 = vector.multi_reduction <maximumf>, %31, %cst_22 [1] : vector<16x8xf32> to vector<16xf32>
    %33 = vector.shape_cast %32 : vector<16xf32> to vector<16x1xf32>
    %34 = vector.broadcast %33 : vector<16x1xf32> to vector<16x8xf32>
    %35 = arith.subf %31, %34 : vector<16x8xf32>
    %36 = math.exp %35 : vector<16x8xf32>
    %cst_23 = arith.constant dense<0.000000e+00> : vector<16xf32>
    %37 = vector.multi_reduction <add>, %36, %cst_23 [1] : vector<16x8xf32> to vector<16xf32>
    %38 = vector.shape_cast %37 : vector<16xf32> to vector<16x1xf32>
    %39 = tpu.reciprocal %38 {approx = true} : vector<16x1xf32> -> vector<16x1xf32>
    %40 = vector.broadcast %39 : vector<16x1xf32> to vector<16x8xf32>
    %41 = arith.mulf %36, %40 : vector<16x8xf32>
    %42 = vector.shape_cast %41 : vector<16x8xf32> to vector<16x8x1xf32>
    %43 = arith.addf %9, %26 : vector<16x8x32xf32>
    %44 = vector.broadcast %42 : vector<16x8x1xf32> to vector<16x8x32xf32>
    %45 = arith.mulf %44, %43 : vector<16x8x32xf32>
    %cst_24 = arith.constant dense<0.000000e+00> : vector<16x32xf32>
    %46 = vector.multi_reduction <add>, %45, %cst_24 [1] : vector<16x8x32xf32> to vector<16x32xf32>
    %cst_25 = arith.constant dense<0xFF800000> : vector<16xf32>
    %47 = vector.multi_reduction <maximumf>, %5, %cst_25 [1] : vector<16x8xf32> to vector<16xf32>
    %48 = vector.shape_cast %47 : vector<16xf32> to vector<16x1xf32>
    %49 = tpu.iota {dimensions = array<i32: 1>} : vector<16x8xi32>
    %50 = vector.broadcast %48 : vector<16x1xf32> to vector<16x8xf32>
    %51 = arith.cmpf oeq, %5, %50 : vector<16x8xf32>
    %c8_i32 = arith.constant 8 : i32
    %52 = vector.broadcast %c8_i32 : i32 to vector<16x8xi32>
    %53 = arith.select %51, %49, %52 : vector<16x8xi1>, vector<16x8xi32>
    %cst_26 = arith.constant dense<2147483647> : vector<16xi32>
    %54 = vector.multi_reduction <minsi>, %53, %cst_26 [1] : vector<16x8xi32> to vector<16xi32>
    %55 = vector.shape_cast %54 : vector<16xi32> to vector<16x1xi32>
    %56 = vector.broadcast %55 : vector<16x1xi32> to vector<16x8xi32>
    %57 = arith.cmpi eq, %49, %56 : vector<16x8xi32>
    %58 = arith.extui %57 : vector<16x8xi1> to vector<16x8xi32>
    %59 = arith.sitofp %58 : vector<16x8xi32> to vector<16x8xf32>
    %60 = vector.shape_cast %59 : vector<16x8xf32> to vector<16x8x1xf32>
    %61 = vector.broadcast %60 : vector<16x8x1xf32> to vector<16x8x32xf32>
    %62 = arith.mulf %61, %9 : vector<16x8x32xf32>
    %cst_27 = arith.constant dense<0.000000e+00> : vector<16x32xf32>
    %63 = vector.multi_reduction <add>, %62, %cst_27 [1] : vector<16x8x32xf32> to vector<16x32xf32>
    %64 = vector.broadcast %1 : f32 to vector<16x32xf32>
    %65 = arith.mulf %63, %64 : vector<16x32xf32>
    %66 = vector.shape_cast %65 : vector<16x32xf32> to vector<16x1x32xf32>
    %67 = vector.broadcast %66 : vector<16x1x32xf32> to vector<16x8x32xf32>
    %68 = arith.mulf %67, %9 : vector<16x8x32xf32>
    %cst_28 = arith.constant dense<0.000000e+00> : vector<16x8xf32>
    %69 = vector.multi_reduction <add>, %68, %cst_28 [2] : vector<16x8x32xf32> to vector<16x8xf32>
    %cst_29 = arith.constant dense<0xFF800000> : vector<16xf32>
    %70 = vector.multi_reduction <maximumf>, %69, %cst_29 [1] : vector<16x8xf32> to vector<16xf32>
    %71 = vector.shape_cast %70 : vector<16xf32> to vector<16x1xf32>
    %72 = vector.broadcast %71 : vector<16x1xf32> to vector<16x8xf32>
    %73 = arith.subf %69, %72 : vector<16x8xf32>
    %74 = math.exp %73 : vector<16x8xf32>
    %cst_30 = arith.constant dense<0.000000e+00> : vector<16xf32>
    %75 = vector.multi_reduction <add>, %74, %cst_30 [1] : vector<16x8xf32> to vector<16xf32>
    %76 = vector.shape_cast %75 : vector<16xf32> to vector<16x1xf32>
    %77 = tpu.reciprocal %76 {approx = true} : vector<16x1xf32> -> vector<16x1xf32>
    %78 = vector.broadcast %77 : vector<16x1xf32> to vector<16x8xf32>
    %79 = arith.mulf %74, %78 : vector<16x8xf32>
    %80 = vector.shape_cast %79 : vector<16x8xf32> to vector<16x8x1xf32>
    %81 = vector.broadcast %80 : vector<16x8x1xf32> to vector<16x8x32xf32>
    %82 = arith.mulf %81, %9 : vector<16x8x32xf32>
    %cst_31 = arith.constant dense<0.000000e+00> : vector<16x32xf32>
    %83 = vector.multi_reduction <add>, %82, %cst_31 [1] : vector<16x8x32xf32> to vector<16x32xf32>
    %c0_32 = arith.constant 0 : index
    %c0_33 = arith.constant 0 : index
    %84 = vector.load %arg9[%c0_32, %c0_33] : memref<64x32xf32, #tpu.memory_space<vmem>>, vector<32x32xf32>
    %cst_34 = arith.constant dense<0.000000e+00> : vector<16x32xf32>
    %85 = tpu.matmul %46, %84, %cst_34 {dimension_numbers = #tpu.dot_dimension_numbers<[1], [0], [0], [1], [0, 0, 1, 1], [], []>} : vector<16x32xf32>, vector<32x32xf32>, vector<16x32xf32> -> vector<16x32xf32>
    %c32 = arith.constant 32 : index
    %c0_35 = arith.constant 0 : index
    %86 = vector.load %arg9[%c32, %c0_35] : memref<64x32xf32, #tpu.memory_space<vmem>>, vector<32x32xf32>
    %cst_36 = arith.constant dense<0.000000e+00> : vector<16x32xf32>
    %87 = tpu.matmul %83, %86, %cst_36 {dimension_numbers = #tpu.dot_dimension_numbers<[1], [0], [0], [1], [0, 0, 1, 1], [], []>} : vector<16x32xf32>, vector<32x32xf32>, vector<16x32xf32> -> vector<16x32xf32>
    %88 = arith.addf %85, %87 : vector<16x32xf32>
    %c0_37 = arith.constant 0 : index
    %c0_38 = arith.constant 0 : index
    %89 = vector.load %arg10[%c0_37, %c0_38] : memref<64x32xf32, #tpu.memory_space<vmem>>, vector<32x32xf32>
    %cst_39 = arith.constant dense<0.000000e+00> : vector<16x32xf32>
    %90 = tpu.matmul %88, %89, %cst_39 {dimension_numbers = #tpu.dot_dimension_numbers<[1], [0], [0], [1], [0, 0, 1, 1], [], []>} : vector<16x32xf32>, vector<32x32xf32>, vector<16x32xf32> -> vector<16x32xf32>
    %c32_40 = arith.constant 32 : index
    %c0_41 = arith.constant 0 : index
    %91 = vector.load %arg10[%c32_40, %c0_41] : memref<64x32xf32, #tpu.memory_space<vmem>>, vector<32x32xf32>
    %cst_42 = arith.constant dense<0.000000e+00> : vector<16x32xf32>
    %92 = tpu.matmul %3, %91, %cst_42 {dimension_numbers = #tpu.dot_dimension_numbers<[1], [0], [0], [1], [0, 0, 1, 1], [], []>} : vector<16x32xf32>, vector<32x32xf32>, vector<16x32xf32> -> vector<16x32xf32>
    %93 = arith.addf %90, %92 : vector<16x32xf32>
    %94 = math.tanh %93 : vector<16x32xf32>
    %c0_43 = arith.constant 0 : index
    %c0_44 = arith.constant 0 : index
    %95 = vector.load %arg11[%c0_43, %c0_44] : memref<16x32xf32, #tpu.memory_space<vmem>>, vector<16x32xf32>
    tpu.vector_store %arg11[%c0_43, %c0_44], %94 {strides = array<i32>} : memref<16x32xf32, #tpu.memory_space<vmem>>, vector<16x32xf32>,
    return
  }
  func.func @transform_0(%arg0: i32) -> (i32, i32, i32) {
    %c0_i32 = arith.constant 0 : i32
    %c0_i32_0 = arith.constant 0 : i32
    %c0_i32_1 = arith.constant 0 : i32
    return %arg0, %c0_i32, %c0_i32_0 : i32, i32, i32
  }
  func.func @transform_1(%arg0: i32) -> (i32, i32) {
    %c0_i32 = arith.constant 0 : i32
    %c0_i32_0 = arith.constant 0 : i32
    return %arg0, %c0_i32 : i32, i32
  }
  func.func @transform_2(%arg0: i32) -> (i32, i32) {
    %c0_i32 = arith.constant 0 : i32
    %c0_i32_0 = arith.constant 0 : i32
    return %arg0, %c0_i32 : i32, i32
  }
  func.func @transform_3(%arg0: i32) -> (i32, i32) {
    %c0_i32 = arith.constant 0 : i32
    %c0_i32_0 = arith.constant 0 : i32
    return %arg0, %c0_i32 : i32, i32
  }
  func.func @transform_4(%arg0: i32) -> (i32, i32) {
    %c0_i32 = arith.constant 0 : i32
    %c0_i32_0 = arith.constant 0 : i32
    %c0_i32_1 = arith.constant 0 : i32
    return %c0_i32, %c0_i32_0 : i32, i32
  }
  func.func @transform_5(%arg0: i32) -> (i32, i32) {
    %c0_i32 = arith.constant 0 : i32
    %c0_i32_0 = arith.constant 0 : i32
    %c0_i32_1 = arith.constant 0 : i32
    return %c0_i32, %c0_i32_0 : i32, i32
  }
  func.func @transform_6(%arg0: i32) -> (i32, i32) {
    %c0_i32 = arith.constant 0 : i32
    %c0_i32_0 = arith.constant 0 : i32
    %c0_i32_1 = arith.constant 0 : i32
    return %c0_i32, %c0_i32_0 : i32, i32
  }
  func.func @transform_7(%arg0: i32) -> (i32, i32) {
    %c0_i32 = arith.constant 0 : i32
    %c0_i32_0 = arith.constant 0 : i32
    %c0_i32_1 = arith.constant 0 : i32
    return %c0_i32, %c0_i32_0 : i32, i32
  }
  func.func @transform_8(%arg0: i32) -> (i32, i32) {
    %c0_i32 = arith.constant 0 : i32
    %c0_i32_0 = arith.constant 0 : i32
    %c0_i32_1 = arith.constant 0 : i32
    return %c0_i32, %c0_i32_0 : i32, i32
  }
  func.func @transform_9(%arg0: i32) -> (i32, i32) {
    %c0_i32 = arith.constant 0 : i32
    %c0_i32_0 = arith.constant 0 : i32
    %c0_i32_1 = arith.constant 0 : i32
    return %c0_i32, %c0_i32_0 : i32, i32
  }
  func.func @transform_10(%arg0: i32) -> (i32, i32) {
    %c0_i32 = arith.constant 0 : i32
    %c0_i32_0 = arith.constant 0 : i32
    return %arg0, %c0_i32 : i32, i32
  }
}

</mosaic_0001>

<llo_original>
// kernel: tpu_custom_call.1
$region0: #{tpu_custom_call.1}
  #allocation0 [shape = 'u32[]', space=smem, size = 0x4, offset = 0x4, fixed_abs, tag = 'smem constant byte address 0x4 - core index']
  #allocation1 [shape = 'u32[144,128]{1,0:T(1,128)}', space=vmem, size = 0x12000, scoped, tag = 'internal scratch']
  %s0 = inlined_call_operand.vmem [shape: f32[16,8,32], index: 0, kind: input, shape index: {}]
  %s1 = inlined_call_operand.vmem [shape: f32[16,32], index: 1, kind: input, shape index: {}]
  %s2 = inlined_call_operand.vmem [shape: s32[16,8], index: 2, kind: input, shape index: {}]
  %s3 = inlined_call_operand.vmem [shape: f32[16,8], index: 3, kind: input, shape index: {}]
  %s4 = inlined_call_operand.vmem [shape: f32[32,32], index: 4, kind: input, shape index: {}]
  %s5 = inlined_call_operand.vmem [shape: f32[32,32], index: 5, kind: input, shape index: {}]
  %s6 = inlined_call_operand.vmem [shape: f32[50,32], index: 6, kind: input, shape index: {}]
  %s7 = inlined_call_operand.vmem [shape: f32[50,32], index: 7, kind: input, shape index: {}]
  %s8 = inlined_call_operand.vmem [shape: f32[64,32], index: 8, kind: input, shape index: {}]
  %s9 = inlined_call_operand.vmem [shape: f32[64,32], index: 9, kind: input, shape index: {}]
  %s10 = inlined_call_operand.hbm [shape: f32[16,32], index: 10, kind: output, shape index: {}]
  %s11 = sld [smem:[#allocation0]]
  $region50: #{tpu_custom_call.1} parent=0
    _
  %s13 = ssub.s32 1, %s11
  %s14 = scalar_select 0, %s13, %s11
  $region1: #{tpu_custom_call.1} parent=0
    #allocation2 [shape = 'u8[8192]{0}', space=vmem, size = 0x2000, scoped, tag = 'output window, operand 0, single buffered']
    #allocation3 [shape = 's32[1]{0}', space=sflag, size = 0x4, scoped, tag = 'scoped memory for tpu_custom_call.1']
    %15 = vsyncpa [#allocation3], 0
    // Predicated region
    $region2: #{tpu_custom_call.1} parent=1 // pred_check
      _
    $region3: #{tpu_custom_call.1} parent=1 // pred_check_branch
      %17 = sbr.rel (0) target = $region5
    $region4: #{tpu_custom_call.1} parent=1 // pred_region
      _
    $region5: #{tpu_custom_call.1} parent=1 // pred_fallthru
      _
    // Predicated region
    $region6: #{tpu_custom_call.1} parent=1 // pred_check
      _
    $region7: #{tpu_custom_call.1} parent=1 // pred_check_branch
      %19 = sbr.rel (0) target = $region9
    $region8: #{tpu_custom_call.1} parent=1 // pred_region
      _
    $region9: #{tpu_custom_call.1} parent=1 // pred_fallthru
      _
    // Predicated region
    $region10: #{tpu_custom_call.1} parent=1 // pred_check
      _
    $region11: #{tpu_custom_call.1} parent=1 // pred_check_branch
      %21 = sbr.rel (0) target = $region13
    $region12: #{tpu_custom_call.1} parent=1 // pred_region
      _
    $region13: #{tpu_custom_call.1} parent=1 // pred_fallthru
      _
    // Predicated region
    $region14: #{tpu_custom_call.1} parent=1 // pred_check
      _
    $region15: #{tpu_custom_call.1} parent=1 // pred_check_branch
      %23 = sbr.rel (0) target = $region17
    $region16: #{tpu_custom_call.1} parent=1 // pred_region
      _
    $region17: #{tpu_custom_call.1} parent=1 // pred_fallthru
      _
    // Predicated region
    $region18: #{tpu_custom_call.1} parent=1 // pred_check
      _
    $region19: #{tpu_custom_call.1} parent=1 // pred_check_branch
      %25 = sbr.rel (0) target = $region21
    $region20: #{tpu_custom_call.1} parent=1 // pred_region
      _
    $region21: #{tpu_custom_call.1} parent=1 // pred_fallthru
      _
    // Predicated region
    $region22: #{tpu_custom_call.1} parent=1 // pred_check
      _
    $region23: #{tpu_custom_call.1} parent=1 // pred_check_branch
      %27 = sbr.rel (0) target = $region25
    $region24: #{tpu_custom_call.1} parent=1 // pred_region
      _
    $region25: #{tpu_custom_call.1} parent=1 // pred_fallthru
      _
    // Predicated region
    $region26: #{tpu_custom_call.1} parent=1 // pred_check
      _
    $region27: #{tpu_custom_call.1} parent=1 // pred_check_branch
      %29 = sbr.rel (0) target = $region29
    $region28: #{tpu_custom_call.1} parent=1 // pred_region
      _
    $region29: #{tpu_custom_call.1} parent=1 // pred_fallthru
      _
    // Predicated region
    $region30: #{tpu_custom_call.1} parent=1 // pred_check
      _
    $region31: #{tpu_custom_call.1} parent=1 // pred_check_branch
      %31 = sbr.rel (0) target = $region33
    $region32: #{tpu_custom_call.1} parent=1 // pred_region
      _
    $region33: #{tpu_custom_call.1} parent=1 // pred_fallthru
      _
    // Predicated region
    $region34: #{tpu_custom_call.1} parent=1 // pred_check
      _
    $region35: #{tpu_custom_call.1} parent=1 // pred_check_branch
      %33 = sbr.rel (0) target = $region37
    $region36: #{tpu_custom_call.1} parent=1 // pred_region
      _
    $region37: #{tpu_custom_call.1} parent=1 // pred_fallthru
      _
    // Predicated region
    $region38: #{tpu_custom_call.1} parent=1 // pred_check
      _
    $region39: #{tpu_custom_call.1} parent=1 // pred_check_branch
      %35 = sbr.rel (0) target = $region41
    $region40: #{tpu_custom_call.1} parent=1 // pred_region
      _
    $region41: #{tpu_custom_call.1} parent=1 // pred_fallthru
      _
    %v36 = vld [vmem:[%s0] sm:$0xff]
    %v37 = vld [vmem:[%s0 + $0x8] sm:$0xff]
    %v38 = vld [vmem:[%s0 + $0x10] sm:$0xff]
    %v39 = vld [vmem:[%s0 + $0x18] sm:$0xff]
    %v40 = vld [vmem:[%s0 + $0x20] sm:$0xff]
    %v41 = vld [vmem:[%s0 + $0x28] sm:$0xff]
    %v42 = vld [vmem:[%s0 + $0x30] sm:$0xff]
    %v43 = vld [vmem:[%s0 + $0x38] sm:$0xff]
    %v44 = vld [vmem:[%s0 + $0x40] sm:$0xff]
    %v45 = vld [vmem:[%s0 + $0x48] sm:$0xff]
    %v46 = vld [vmem:[%s0 + $0x50] sm:$0xff]
    %v47 = vld [vmem:[%s0 + $0x58] sm:$0xff]
    %v48 = vld [vmem:[%s0 + $0x60] sm:$0xff]
    %v49 = vld [vmem:[%s0 + $0x68] sm:$0xff]
    %v50 = vld [vmem:[%s0 + $0x70] sm:$0xff]
    %v51 = vld [vmem:[%s0 + $0x78] sm:$0xff]
    %v52 = vld [vmem:[%s1] sm:$0xff]
    %v53 = vld [vmem:[%s1 + $0x8] sm:$0xff]
    %v54 = vld [vmem:[%s2] sm:$0xff]
    %v55 = vld [vmem:[%s2 + $0x8] sm:$0xff]
    %v56 = vld [vmem:[%s3] sm:$0xff]
    %v57 = vld [vmem:[%s3 + $0x8] sm:$0xff]
    %v58 = vld [vmem:[%s4] sm:$0xff]
    %v59 = vld [vmem:[%s4 + $0x8] sm:$0xff]
    %v60 = vld [vmem:[%s4 + $0x10] sm:$0xff]
    %v61 = vld [vmem:[%s4 + $0x18] sm:$0xff]
    %vm62 = vcmask 261120
    %v64 = vsel %vm62, %v36, 0
    %v67 = vsel %vm62, %v37, 0
    %v70 = vsel %vm62, %v38, 0
    %v73 = vsel %vm62, %v39, 0
    %v76 = vsel %vm62, %v40, 0
    %v79 = vsel %vm62, %v41, 0
    %v82 = vsel %vm62, %v42, 0
    %v85 = vsel %vm62, %v43, 0
    %v88 = vsel %vm62, %v44, 0
    %v91 = vsel %vm62, %v45, 0
    %v94 = vsel %vm62, %v46, 0
    %v97 = vsel %vm62, %v47, 0
    %v100 = vsel %vm62, %v48, 0
    %v103 = vsel %vm62, %v49, 0
    %v106 = vsel %vm62, %v50, 0
    %v109 = vsel %vm62, %v51, 0
    %111 = vmatprep.subr.mxu0 0.0
    %112 = vmatpush1.msra.mxu0 %v58
    %113 = vmatprep.subr.mxu0 0.0
    %114 = vmatpush1.msra.mxu0 %v59
    %115 = vmatprep.subr.mxu0 0.0
    %116 = vmatpush1.msra.mxu0 %v60
    %117 = vmatprep.subr.mxu0 0.0
    %118 = vmatpush1.msra.mxu0 %v61
    %119 = vmatprep.subr.mxu0 0.0
    %120 = vmatpush1.msra.mxu0 0.0
    %121 = vmatprep.subr.mxu0 0.0
    %122 = vmatpush1.msra.mxu0 0.0
    %123 = vmatprep.subr.mxu0 0.0
    %124 = vmatpush1.msra.mxu0 0.0
    %125 = vmatprep.subr.mxu0 0.0
    %126 = vmatpush1.msra.mxu0 0.0
    %127 = vmatprep.subr.mxu0 0.0
    %128 = vmatpush1.msra.mxu0 0.0
    %129 = vmatprep.subr.mxu0 0.0
    %130 = vmatpush1.msra.mxu0 0.0
    %131 = vmatprep.subr.mxu0 0.0
    %132 = vmatpush1.msra.mxu0 0.0
    %133 = vmatprep.subr.mxu0 0.0
    %134 = vmatpush1.msra.mxu0 0.0
    %135 = vmatprep.subr.mxu0 0.0
    %136 = vmatpush1.msra.mxu0 0.0
    %137 = vmatprep.subr.mxu0 0.0
    %138 = vmatpush1.msra.mxu0 0.0
    %139 = vmatprep.subr.mxu0 0.0
    %140 = vmatpush1.msra.mxu0 0.0
    %141 = vmatprep.subr.mxu0 0.0
    %142 = vmatpush1.msra.mxu0 0.0
    %143 = vmatprep.subr.mxu0 0.0
    %144 = vmatpush1.msra.mxu0 0.0
    %145 = vmatprep.subr.mxu0 0.0
    %146 = vmatpush1.msra.mxu0 0.0
    %147 = vmatprep.subr.mxu0 0.0
    %148 = vmatpush1.msra.mxu0 0.0
    %149 = vmatprep.subr.mxu0 0.0
    %150 = vmatpush1.msra.mxu0 0.0
    %151 = vmatprep.subr.mxu0 0.0
    %152 = vmatpush1.msra.mxu0 0.0
    %153 = vmatprep.subr.mxu0 0.0
    %154 = vmatpush1.msra.mxu0 0.0
    %155 = vmatprep.subr.mxu0 0.0
    %156 = vmatpush1.msra.mxu0 0.0
    %157 = vmatprep.subr.mxu0 0.0
    %158 = vmatpush1.msra.mxu0 0.0
    %159 = vmatprep.subr.mxu0 0.0
    %160 = vmatpush1.msra.mxu0 0.0
    %161 = vmatprep.subr.mxu0 0.0
    %162 = vmatpush1.msra.mxu0 0.0
    %163 = vmatprep.subr.mxu0 0.0
    %164 = vmatpush1.msra.mxu0 0.0
    %165 = vmatprep.subr.mxu0 0.0
    %166 = vmatpush1.msra.mxu0 0.0
    %167 = vmatprep.subr.mxu0 0.0
    %168 = vmatpush1.msra.mxu0 0.0
    %169 = vmatprep.subr.mxu0 0.0
    %170 = vmatpush1.msra.mxu0 0.0
    %171 = vmatprep.subr.mxu0 0.0
    %172 = vmatpush1.msra.mxu0 0.0
    %173 = vmatprep.subr.mxu0 0.0
    %174 = vmatpush1.msra.mxu0 0.0
    %175 = vmatprep.mubr.f32.mxu0 0.0
    %176 = vmatmul.mubr.f32.gmra.mrb[0].mxu0 %v64
    %v177 = vpop.f32.mrb[0].mxu0
    %v178 = vadd.f32 0.0, %v177
    %v179 = vpop.f32.mrb[0].mxu0
    %180 = vmatprep.mubr.f32.mxu0 0.0
    %181 = vmatmul.mubr.f32.gmra.mrb[0].mxu0 %v67
    %v182 = vpop.f32.mrb[0].mxu0
    %v183 = vadd.f32 0.0, %v182
    %v184 = vpop.f32.mrb[0].mxu0
    %185 = vmatprep.mubr.f32.mxu0 0.0
    %186 = vmatmul.mubr.f32.gmra.mrb[0].mxu0 %v70
    %v187 = vpop.f32.mrb[0].mxu0
    %v188 = vadd.f32 0.0, %v187
    %v189 = vpop.f32.mrb[0].mxu0
    %190 = vmatprep.mubr.f32.mxu0 0.0
    %191 = vmatmul.mubr.f32.gmra.mrb[0].mxu0 %v73
    %v192 = vpop.f32.mrb[0].mxu0
    %v193 = vadd.f32 0.0, %v192
    %v194 = vpop.f32.mrb[0].mxu0
    %195 = vmatprep.mubr.f32.mxu0 0.0
    %196 = vmatmul.mubr.f32.gmra.mrb[0].mxu0 %v76
    %v197 = vpop.f32.mrb[0].mxu0
    %v198 = vadd.f32 0.0, %v197
    %v199 = vpop.f32.mrb[0].mxu0
    %200 = vmatprep.mubr.f32.mxu0 0.0
    %201 = vmatmul.mubr.f32.gmra.mrb[0].mxu0 %v79
    %v202 = vpop.f32.mrb[0].mxu0
    %v203 = vadd.f32 0.0, %v202
    %v204 = vpop.f32.mrb[0].mxu0
    %205 = vmatprep.mubr.f32.mxu0 0.0
    %206 = vmatmul.mubr.f32.gmra.mrb[0].mxu0 %v82
    %v207 = vpop.f32.mrb[0].mxu0
    %v208 = vadd.f32 0.0, %v207
    %v209 = vpop.f32.mrb[0].mxu0
    %210 = vmatprep.mubr.f32.mxu0 0.0
    %211 = vmatmul.mubr.f32.gmra.mrb[0].mxu0 %v85
    %v212 = vpop.f32.mrb[0].mxu0
    %v213 = vadd.f32 0.0, %v212
    %v214 = vpop.f32.mrb[0].mxu0
    %215 = vmatprep.mubr.f32.mxu0 0.0
    %216 = vmatmul.mubr.f32.gmra.mrb[0].mxu0 %v88
    %v217 = vpop.f32.mrb[0].mxu0
    %v218 = vadd.f32 0.0, %v217
    %v219 = vpop.f32.mrb[0].mxu0
    %220 = vmatprep.mubr.f32.mxu0 0.0
    %221 = vmatmul.mubr.f32.gmra.mrb[0].mxu0 %v91
    %v222 = vpop.f32.mrb[0].mxu0
    %v223 = vadd.f32 0.0, %v222
    %v224 = vpop.f32.mrb[0].mxu0
    %225 = vmatprep.mubr.f32.mxu0 0.0
    %226 = vmatmul.mubr.f32.gmra.mrb[0].mxu0 %v94
    %v227 = vpop.f32.mrb[0].mxu0
    %v228 = vadd.f32 0.0, %v227
    %v229 = vpop.f32.mrb[0].mxu0
    %230 = vmatprep.mubr.f32.mxu0 0.0
    %231 = vmatmul.mubr.f32.gmra.mrb[0].mxu0 %v97
    %v232 = vpop.f32.mrb[0].mxu0
    %v233 = vadd.f32 0.0, %v232
    %v234 = vpop.f32.mrb[0].mxu0
    %235 = vmatprep.mubr.f32.mxu0 0.0
    %236 = vmatmul.mubr.f32.gmra.mrb[0].mxu0 %v100
    %v237 = vpop.f32.mrb[0].mxu0
    %v238 = vadd.f32 0.0, %v237
    %v239 = vpop.f32.mrb[0].mxu0
    %240 = vmatprep.mubr.f32.mxu0 0.0
    %241 = vmatmul.mubr.f32.gmra.mrb[0].mxu0 %v103
    %v242 = vpop.f32.mrb[0].mxu0
    %v243 = vadd.f32 0.0, %v242
    %v244 = vpop.f32.mrb[0].mxu0
    %245 = vmatprep.mubr.f32.mxu0 0.0
    %246 = vmatmul.mubr.f32.gmra.mrb[0].mxu0 %v106
    %v247 = vpop.f32.mrb[0].mxu0
    %v248 = vadd.f32 0.0, %v247
    %v249 = vpop.f32.mrb[0].mxu0
    %250 = vmatprep.mubr.f32.mxu0 0.0
    %251 = vmatmul.mubr.f32.gmra.mrb[0].mxu0 %v109
    %v252 = vpop.f32.mrb[0].mxu0
    %v253 = vadd.f32 0.0, %v252
    %v254 = vpop.f32.mrb[0].mxu0
    %255 = vdwg.mxu0
    %v256 = vld [vmem:[%s5] sm:$0xff]
    %v257 = vld [vmem:[%s5 + $0x8] sm:$0xff]
    %v258 = vld [vmem:[%s5 + $0x10] sm:$0xff]
    %v259 = vld [vmem:[%s5 + $0x18] sm:$0xff]
    %v261 = vsel %vm62, %v52, 0
    %v264 = vsel %vm62, %v53, 0
    %266 = vmatprep.subr.mxu0 0.0
    %267 = vmatpush1.msra.mxu0 %v256
    %268 = vmatprep.subr.mxu0 0.0
    %269 = vmatpush1.msra.mxu0 %v257
    %270 = vmatprep.subr.mxu0 0.0
    %271 = vmatpush1.msra.mxu0 %v258
    %272 = vmatprep.subr.mxu0 0.0
    %273 = vmatpush1.msra.mxu0 %v259
    %274 = vmatprep.subr.mxu0 0.0
    %275 = vmatpush1.msra.mxu0 0.0
    %276 = vmatprep.subr.mxu0 0.0
    %277 = vmatpush1.msra.mxu0 0.0
    %278 = vmatprep.subr.mxu0 0.0
    %279 = vmatpush1.msra.mxu0 0.0
    %280 = vmatprep.subr.mxu0 0.0
    %281 = vmatpush1.msra.mxu0 0.0
    %282 = vmatprep.subr.mxu0 0.0
    %283 = vmatpush1.msra.mxu0 0.0
    %284 = vmatprep.subr.mxu0 0.0
    %285 = vmatpush1.msra.mxu0 0.0
    %286 = vmatprep.subr.mxu0 0.0
    %287 = vmatpush1.msra.mxu0 0.0
    %288 = vmatprep.subr.mxu0 0.0
    %289 = vmatpush1.msra.mxu0 0.0
    %290 = vmatprep.subr.mxu0 0.0
    %291 = vmatpush1.msra.mxu0 0.0
    %292 = vmatprep.subr.mxu0 0.0
    %293 = vmatpush1.msra.mxu0 0.0
    %294 = vmatprep.subr.mxu0 0.0
    %295 = vmatpush1.msra.mxu0 0.0
    %296 = vmatprep.subr.mxu0 0.0
    %297 = vmatpush1.msra.mxu0 0.0
    %298 = vmatprep.subr.mxu0 0.0
    %299 = vmatpush1.msra.mxu0 0.0
    %300 = vmatprep.subr.mxu0 0.0
    %301 = vmatpush1.msra.mxu0 0.0
    %302 = vmatprep.subr.mxu0 0.0
    %303 = vmatpush1.msra.mxu0 0.0
    %304 = vmatprep.subr.mxu0 0.0
    %305 = vmatpush1.msra.mxu0 0.0
    %306 = vmatprep.subr.mxu0 0.0
    %307 = vmatpush1.msra.mxu0 0.0
    %308 = vmatprep.subr.mxu0 0.0
    %309 = vmatpush1.msra.mxu0 0.0
    %310 = vmatprep.subr.mxu0 0.0
    %311 = vmatpush1.msra.mxu0 0.0
    %312 = vmatprep.subr.mxu0 0.0
    %313 = vmatpush1.msra.mxu0 0.0
    %314 = vmatprep.subr.mxu0 0.0
    %315 = vmatpush1.msra.mxu0 0.0
    %316 = vmatprep.subr.mxu0 0.0
    %317 = vmatpush1.msra.mxu0 0.0
    %318 = vmatprep.subr.mxu0 0.0
    %319 = vmatpush1.msra.mxu0 0.0
    %320 = vmatprep.subr.mxu0 0.0
    %321 = vmatpush1.msra.mxu0 0.0
    %322 = vmatprep.subr.mxu0 0.0
    %323 = vmatpush1.msra.mxu0 0.0
    %324 = vmatprep.subr.mxu0 0.0
    %325 = vmatpush1.msra.mxu0 0.0
    %326 = vmatprep.subr.mxu0 0.0
    %327 = vmatpush1.msra.mxu0 0.0
    %328 = vmatprep.subr.mxu0 0.0
    %329 = vmatpush1.msra.mxu0 0.0
    %330 = vmatprep.mubr.f32.mxu0 0.0
    %331 = vmatmul.mubr.f32.gmra.mrb[0].mxu0 %v261
    %v332 = vpop.f32.mrb[0].mxu0
    %v333 = vadd.f32 0.0, %v332
    %v334 = vpop.f32.mrb[0].mxu0
    %335 = vmatprep.mubr.f32.mxu0 0.0
    %336 = vmatmul.mubr.f32.gmra.mrb[0].mxu0 %v264
    %v337 = vpop.f32.mrb[0].mxu0
    %v338 = vadd.f32 0.0, %v337
    %v339 = vpop.f32.mrb[0].mxu0
    %340 = vdwg.mxu0
    %v341 = vmul.f32 %v333, 0.17677669
    %v342 = vmul.f32 %v338, 0.17677669
    %v343 = vlaneseq
    %v344 = vand.u32 %v343, 127
    %v345 = vlaneseq
    %v346 = vshrl.u32 %v345, 7
    %v347 = vsub.s32 0, %v346
    %v348 = vrot.slane %v54, %v347
    %350 = vbcast.lane.b32.xlu0 %v348, 256
    %v351 = vpop.permute.xlu0 %350
    %v352 = vlaneseq
    %v353 = vshrl.u32 %v352, 7
    %v354 = vsub.s32 1, %v353
    %v355 = vrot.slane %v54, %v354
    %357 = vbcast.lane.b32.xlu0 %v355, 256
    %v358 = vpop.permute.xlu0 %357
    %v359 = vlaneseq
    %v360 = vshrl.u32 %v359, 7
    %v361 = vsub.s32 2, %v360
    %v362 = vrot.slane %v54, %v361
    %364 = vbcast.lane.b32.xlu0 %v362, 256
    %v365 = vpop.permute.xlu0 %364
    %v366 = vlaneseq
    %v367 = vshrl.u32 %v366, 7
    %v368 = vsub.s32 3, %v367
    %v369 = vrot.slane %v54, %v368
    %371 = vbcast.lane.b32.xlu0 %v369, 256
    %v372 = vpop.permute.xlu0 %371
    %v373 = vlaneseq
    %v374 = vshrl.u32 %v373, 7
    %v375 = vsub.s32 4, %v374
    %v376 = vrot.slane %v54, %v375
    %378 = vbcast.lane.b32.xlu0 %v376, 256
    %v379 = vpop.permute.xlu0 %378
    %v380 = vlaneseq
    %v381 = vshrl.u32 %v380, 7
    %v382 = vsub.s32 5, %v381
    %v383 = vrot.slane %v54, %v382
    %385 = vbcast.lane.b32.xlu0 %v383, 256
    %v386 = vpop.permute.xlu0 %385
    %v387 = vlaneseq
    %v388 = vshrl.u32 %v387, 7
    %v389 = vsub.s32 6, %v388
    %v390 = vrot.slane %v54, %v389
    %392 = vbcast.lane.b32.xlu0 %v390, 256
    %v393 = vpop.permute.xlu0 %392
    %v394 = vlaneseq
    %v395 = vshrl.u32 %v394, 7
    %v396 = vsub.s32 7, %v395
    %v397 = vrot.slane %v54, %v396
    %399 = vbcast.lane.b32.xlu0 %v397, 256
    %v400 = vpop.permute.xlu0 %399
    %v401 = vlaneseq
    %v402 = vshrl.u32 %v401, 7
    %v403 = vsub.s32 0, %v402
    %v404 = vrot.slane %v55, %v403
    %406 = vbcast.lane.b32.xlu0 %v404, 256
    %v407 = vpop.permute.xlu0 %406
    %v408 = vlaneseq
    %v409 = vshrl.u32 %v408, 7
    %v410 = vsub.s32 1, %v409
    %v411 = vrot.slane %v55, %v410
    %413 = vbcast.lane.b32.xlu0 %v411, 256
    %v414 = vpop.permute.xlu0 %413
    %v415 = vlaneseq
    %v416 = vshrl.u32 %v415, 7
    %v417 = vsub.s32 2, %v416
    %v418 = vrot.slane %v55, %v417
    %420 = vbcast.lane.b32.xlu0 %v418, 256
    %v421 = vpop.permute.xlu0 %420
    %v422 = vlaneseq
    %v423 = vshrl.u32 %v422, 7
    %v424 = vsub.s32 3, %v423
    %v425 = vrot.slane %v55, %v424
    %427 = vbcast.lane.b32.xlu0 %v425, 256
    %v428 = vpop.permute.xlu0 %427
    %v429 = vlaneseq
    %v430 = vshrl.u32 %v429, 7
    %v431 = vsub.s32 4, %v430
    %v432 = vrot.slane %v55, %v431
    %434 = vbcast.lane.b32.xlu0 %v432, 256
    %v435 = vpop.permute.xlu0 %434
    %v436 = vlaneseq
    %v437 = vshrl.u32 %v436, 7
    %v438 = vsub.s32 5, %v437
    %v439 = vrot.slane %v55, %v438
    %441 = vbcast.lane.b32.xlu0 %v439, 256
    %v442 = vpop.permute.xlu0 %441
    %v443 = vlaneseq
    %v444 = vshrl.u32 %v443, 7
    %v445 = vsub.s32 6, %v444
    %v446 = vrot.slane %v55, %v445
    %448 = vbcast.lane.b32.xlu0 %v446, 256
    %v449 = vpop.permute.xlu0 %448
    %v450 = vlaneseq
    %v451 = vshrl.u32 %v450, 7
    %v452 = vsub.s32 7, %v451
    %v453 = vrot.slane %v55, %v452
    %455 = vbcast.lane.b32.xlu0 %v453, 256
    %v456 = vpop.permute.xlu0 %455
    %vm457 = vcmp.eq.s32.totalorder %v351, %v344
    %vm458 = vcmp.eq.s32.totalorder %v358, %v344
    %vm459 = vcmp.eq.s32.totalorder %v365, %v344
    %vm460 = vcmp.eq.s32.totalorder %v372, %v344
    %vm461 = vcmp.eq.s32.totalorder %v379, %v344
    %vm462 = vcmp.eq.s32.totalorder %v386, %v344
    %vm463 = vcmp.eq.s32.totalorder %v393, %v344
    %vm464 = vcmp.eq.s32.totalorder %v400, %v344
    %vm465 = vcmp.eq.s32.totalorder %v407, %v344
    %vm466 = vcmp.eq.s32.totalorder %v414, %v344
    %vm467 = vcmp.eq.s32.totalorder %v421, %v344
    %vm468 = vcmp.eq.s32.totalorder %v428, %v344
    %vm469 = vcmp.eq.s32.totalorder %v435, %v344
    %vm470 = vcmp.eq.s32.totalorder %v442, %v344
    %vm471 = vcmp.eq.s32.totalorder %v449, %v344
    %vm472 = vcmp.eq.s32.totalorder %v456, %v344
    %v473 = vsel %vm457, 1, 0
    %v474 = vsel %vm458, 1, 0
    %v475 = vsel %vm459, 1, 0
    %v476 = vsel %vm460, 1, 0
    %v477 = vsel %vm461, 1, 0
    %v478 = vsel %vm462, 1, 0
    %v479 = vsel %vm463, 1, 0
    %v480 = vsel %vm464, 1, 0
    %v481 = vsel %vm465, 1, 0
    %v482 = vsel %vm466, 1, 0
    %v483 = vsel %vm467, 1, 0
    %v484 = vsel %vm468, 1, 0
    %v485 = vsel %vm469, 1, 0
    %v486 = vsel %vm470, 1, 0
    %v487 = vsel %vm471, 1, 0
    %v488 = vsel %vm472, 1, 0
    %v489 = vcvt.s32.f32 %v473
    %v490 = vcvt.s32.f32 %v474
    %v491 = vcvt.s32.f32 %v475
    %v492 = vcvt.s32.f32 %v476
    %v493 = vcvt.s32.f32 %v477
    %v494 = vcvt.s32.f32 %v478
    %v495 = vcvt.s32.f32 %v479
    %v496 = vcvt.s32.f32 %v480
    %v497 = vcvt.s32.f32 %v481
    %v498 = vcvt.s32.f32 %v482
    %v499 = vcvt.s32.f32 %v483
    %v500 = vcvt.s32.f32 %v484
    %v501 = vcvt.s32.f32 %v485
    %v502 = vcvt.s32.f32 %v486
    %v503 = vcvt.s32.f32 %v487
    %v504 = vcvt.s32.f32 %v488
    %v505 = vld [vmem:[%s6] sm:$0xff]
    %v506 = vld [vmem:[%s6 + $0x8] sm:$0xff]
    %v507 = vld [vmem:[%s6 + $0x10] sm:$0xff]
    %v508 = vld [vmem:[%s6 + $0x18] sm:$0xff]
    %v509 = vld [vmem:[%s6 + $0x20] sm:$0xff]
    %v510 = vld [vmem:[%s6 + $0x28] sm:$0xff]
    %v511 = vld [vmem:[%s6 + $0x30] sm:$0x3]
    %vm512 = vcmask 408576
    %v514 = vsel %vm512, %v489, 0
    %v517 = vsel %vm512, %v490, 0
    %v520 = vsel %vm512, %v491, 0
    %v523 = vsel %vm512, %v492, 0
    %v526 = vsel %vm512, %v493, 0
    %v529 = vsel %vm512, %v494, 0
    %v532 = vsel %vm512, %v495, 0
    %v535 = vsel %vm512, %v496, 0
    %v538 = vsel %vm512, %v497, 0
    %v541 = vsel %vm512, %v498, 0
    %v544 = vsel %vm512, %v499, 0
    %v547 = vsel %vm512, %v500, 0
    %v550 = vsel %vm512, %v501, 0
    %v553 = vsel %vm512, %v502, 0
    %v556 = vsel %vm512, %v503, 0
    %v559 = vsel %vm512, %v504, 0
    %vm561 = vcmask 1041408
    %v563 = vsel %vm561, %v511, 0
    %565 = vmatprep.subr.mxu0 0.0
    %566 = vmatpush1.msra.mxu0 %v505
    %567 = vmatprep.subr.mxu0 0.0
    %568 = vmatpush1.msra.mxu0 %v506
    %569 = vmatprep.subr.mxu0 0.0
    %570 = vmatpush1.msra.mxu0 %v507
    %571 = vmatprep.subr.mxu0 0.0
    %572 = vmatpush1.msra.mxu0 %v508
    %573 = vmatprep.subr.mxu0 0.0
    %574 = vmatpush1.msra.mxu0 %v509
    %575 = vmatprep.subr.mxu0 0.0
    %576 = vmatpush1.msra.mxu0 %v510
    %577 = vmatprep.subr.mxu0 0.0
    %578 = vmatpush1.msra.mxu0 %v563
    %579 = vmatprep.subr.mxu0 0.0
    %580 = vmatpush1.msra.mxu0 0.0
    %581 = vmatprep.subr.mxu0 0.0
    %582 = vmatpush1.msra.mxu0 0.0
    %583 = vmatprep.subr.mxu0 0.0
    %584 = vmatpush1.msra.mxu0 0.0
    %585 = vmatprep.subr.mxu0 0.0
    %586 = vmatpush1.msra.mxu0 0.0
    %587 = vmatprep.subr.mxu0 0.0
    %588 = vmatpush1.msra.mxu0 0.0
    %589 = vmatprep.subr.mxu0 0.0
    %590 = vmatpush1.msra.mxu0 0.0
    %591 = vmatprep.subr.mxu0 0.0
    %592 = vmatpush1.msra.mxu0 0.0
    %593 = vmatprep.subr.mxu0 0.0
    %594 = vmatpush1.msra.mxu0 0.0
    %595 = vmatprep.subr.mxu0 0.0
    %596 = vmatpush1.msra.mxu0 0.0
    %597 = vmatprep.subr.mxu0 0.0
    %598 = vmatpush1.msra.mxu0 0.0
    %599 = vmatprep.subr.mxu0 0.0
    %600 = vmatpush1.msra.mxu0 0.0
    %601 = vmatprep.subr.mxu0 0.0
    %602 = vmatpush1.msra.mxu0 0.0
    %603 = vmatprep.subr.mxu0 0.0
    %604 = vmatpush1.msra.mxu0 0.0
    %605 = vmatprep.subr.mxu0 0.0
    %606 = vmatpush1.msra.mxu0 0.0
    %607 = vmatprep.subr.mxu0 0.0
    %608 = vmatpush1.msra.mxu0 0.0
    %609 = vmatprep.subr.mxu0 0.0
    %610 = vmatpush1.msra.mxu0 0.0
    %611 = vmatprep.subr.mxu0 0.0
    %612 = vmatpush1.msra.mxu0 0.0
    %613 = vmatprep.subr.mxu0 0.0
    %614 = vmatpush1.msra.mxu0 0.0
    %615 = vmatprep.subr.mxu0 0.0
    %616 = vmatpush1.msra.mxu0 0.0
    %617 = vmatprep.subr.mxu0 0.0
    %618 = vmatpush1.msra.mxu0 0.0
    %619 = vmatprep.subr.mxu0 0.0
    %620 = vmatpush1.msra.mxu0 0.0
    %621 = vmatprep.subr.mxu0 0.0
    %622 = vmatpush1.msra.mxu0 0.0
    %623 = vmatprep.subr.mxu0 0.0
    %624 = vmatpush1.msra.mxu0 0.0
    %625 = vmatprep.subr.mxu0 0.0
    %626 = vmatpush1.msra.mxu0 0.0
    %627 = vmatprep.subr.mxu0 0.0
    %628 = vmatpush1.msra.mxu0 0.0
    %629 = vmatprep.mubr.f32.mxu0 0.0
    %630 = vmatmul.mubr.f32.gmra.mrb[0].mxu0 %v514
    %v631 = vpop.f32.mrb[0].mxu0
    %v632 = vadd.f32 0.0, %v631
    %v633 = vpop.f32.mrb[0].mxu0
    %634 = vmatprep.mubr.f32.mxu0 0.0
    %635 = vmatmul.mubr.f32.gmra.mrb[0].mxu0 %v517
    %v636 = vpop.f32.mrb[0].mxu0
    %v637 = vadd.f32 0.0, %v636
    %v638 = vpop.f32.mrb[0].mxu0
    %639 = vmatprep.mubr.f32.mxu0 0.0
    %640 = vmatmul.mubr.f32.gmra.mrb[0].mxu0 %v520
    %v641 = vpop.f32.mrb[0].mxu0
    %v642 = vadd.f32 0.0, %v641
    %v643 = vpop.f32.mrb[0].mxu0
    %644 = vmatprep.mubr.f32.mxu0 0.0
    %645 = vmatmul.mubr.f32.gmra.mrb[0].mxu0 %v523
    %v646 = vpop.f32.mrb[0].mxu0
    %v647 = vadd.f32 0.0, %v646
    %v648 = vpop.f32.mrb[0].mxu0
    %649 = vmatprep.mubr.f32.mxu0 0.0
    %650 = vmatmul.mubr.f32.gmra.mrb[0].mxu0 %v526
    %v651 = vpop.f32.mrb[0].mxu0
    %v652 = vadd.f32 0.0, %v651
    %v653 = vpop.f32.mrb[0].mxu0
    %654 = vmatprep.mubr.f32.mxu0 0.0
    %655 = vmatmul.mubr.f32.gmra.mrb[0].mxu0 %v529
    %v656 = vpop.f32.mrb[0].mxu0
    %v657 = vadd.f32 0.0, %v656
    %v658 = vpop.f32.mrb[0].mxu0
    %659 = vmatprep.mubr.f32.mxu0 0.0
    %660 = vmatmul.mubr.f32.gmra.mrb[0].mxu0 %v532
    %v661 = vpop.f32.mrb[0].mxu0
    %v662 = vadd.f32 0.0, %v661
    %v663 = vpop.f32.mrb[0].mxu0
    %664 = vmatprep.mubr.f32.mxu0 0.0
    %665 = vmatmul.mubr.f32.gmra.mrb[0].mxu0 %v535
    %v666 = vpop.f32.mrb[0].mxu0
    %v667 = vadd.f32 0.0, %v666
    %v668 = vpop.f32.mrb[0].mxu0
    %669 = vmatprep.mubr.f32.mxu0 0.0
    %670 = vmatmul.mubr.f32.gmra.mrb[0].mxu0 %v538
    %v671 = vpop.f32.mrb[0].mxu0
    %v672 = vadd.f32 0.0, %v671
    %v673 = vpop.f32.mrb[0].mxu0
    %674 = vmatprep.mubr.f32.mxu0 0.0
    %675 = vmatmul.mubr.f32.gmra.mrb[0].mxu0 %v541
    %v676 = vpop.f32.mrb[0].mxu0
    %v677 = vadd.f32 0.0, %v676
    %v678 = vpop.f32.mrb[0].mxu0
    %679 = vmatprep.mubr.f32.mxu0 0.0
    %680 = vmatmul.mubr.f32.gmra.mrb[0].mxu0 %v544
    %v681 = vpop.f32.mrb[0].mxu0
    %v682 = vadd.f32 0.0, %v681
    %v683 = vpop.f32.mrb[0].mxu0
    %684 = vmatprep.mubr.f32.mxu0 0.0
    %685 = vmatmul.mubr.f32.gmra.mrb[0].mxu0 %v547
    %v686 = vpop.f32.mrb[0].mxu0
    %v687 = vadd.f32 0.0, %v686
    %v688 = vpop.f32.mrb[0].mxu0
    %689 = vmatprep.mubr.f32.mxu0 0.0
    %690 = vmatmul.mubr.f32.gmra.mrb[0].mxu0 %v550
    %v691 = vpop.f32.mrb[0].mxu0
    %v692 = vadd.f32 0.0, %v691
    %v693 = vpop.f32.mrb[0].mxu0
    %694 = vmatprep.mubr.f32.mxu0 0.0
    %695 = vmatmul.mubr.f32.gmra.mrb[0].mxu0 %v553
    %v696 = vpop.f32.mrb[0].mxu0
    %v697 = vadd.f32 0.0, %v696
    %v698 = vpop.f32.mrb[0].mxu0
    %699 = vmatprep.mubr.f32.mxu0 0.0
    %700 = vmatmul.mubr.f32.gmra.mrb[0].mxu0 %v556
    %v701 = vpop.f32.mrb[0].mxu0
    %v702 = vadd.f32 0.0, %v701
    %v703 = vpop.f32.mrb[0].mxu0
    %704 = vmatprep.mubr.f32.mxu0 0.0
    %705 = vmatmul.mubr.f32.gmra.mrb[0].mxu0 %v559
    %v706 = vpop.f32.mrb[0].mxu0
    %v707 = vadd.f32 0.0, %v706
    %v708 = vpop.f32.mrb[0].mxu0
    %709 = vdwg.mxu0
    %v710 = vld [vmem:[%s7] sm:$0xff]
    %v711 = vld [vmem:[%s7 + $0x8] sm:$0xff]
    %v712 = vld [vmem:[%s7 + $0x10] sm:$0xff]
    %v713 = vld [vmem:[%s7 + $0x18] sm:$0xff]
    %v714 = vld [vmem:[%s7 + $0x20] sm:$0xff]
    %v715 = vld [vmem:[%s7 + $0x28] sm:$0xff]
    %v716 = vld [vmem:[%s7 + $0x30] sm:$0x3]
    %v718 = vsel %vm561, %v716, 0
    %720 = vmatprep.subr.mxu0 0.0
    %721 = vmatpush1.msra.mxu0 %v710
    %722 = vmatprep.subr.mxu0 0.0
    %723 = vmatpush1.msra.mxu0 %v711
    %724 = vmatprep.subr.mxu0 0.0
    %725 = vmatpush1.msra.mxu0 %v712
    %726 = vmatprep.subr.mxu0 0.0
    %727 = vmatpush1.msra.mxu0 %v713
    %728 = vmatprep.subr.mxu0 0.0
    %729 = vmatpush1.msra.mxu0 %v714
    %730 = vmatprep.subr.mxu0 0.0
    %731 = vmatpush1.msra.mxu0 %v715
    %732 = vmatprep.subr.mxu0 0.0
    %733 = vmatpush1.msra.mxu0 %v718
    %734 = vmatprep.subr.mxu0 0.0
    %735 = vmatpush1.msra.mxu0 0.0
    %736 = vmatprep.subr.mxu0 0.0
    %737 = vmatpush1.msra.mxu0 0.0
    %738 = vmatprep.subr.mxu0 0.0
    %739 = vmatpush1.msra.mxu0 0.0
    %740 = vmatprep.subr.mxu0 0.0
    %741 = vmatpush1.msra.mxu0 0.0
    %742 = vmatprep.subr.mxu0 0.0
    %743 = vmatpush1.msra.mxu0 0.0
    %744 = vmatprep.subr.mxu0 0.0
    %745 = vmatpush1.msra.mxu0 0.0
    %746 = vmatprep.subr.mxu0 0.0
    %747 = vmatpush1.msra.mxu0 0.0
    %748 = vmatprep.subr.mxu0 0.0
    %749 = vmatpush1.msra.mxu0 0.0
    %750 = vmatprep.subr.mxu0 0.0
    %751 = vmatpush1.msra.mxu0 0.0
    %752 = vmatprep.subr.mxu0 0.0
    %753 = vmatpush1.msra.mxu0 0.0
    %754 = vmatprep.subr.mxu0 0.0
    %755 = vmatpush1.msra.mxu0 0.0
    %756 = vmatprep.subr.mxu0 0.0
    %757 = vmatpush1.msra.mxu0 0.0
    %758 = vmatprep.subr.mxu0 0.0
    %759 = vmatpush1.msra.mxu0 0.0
    %760 = vmatprep.subr.mxu0 0.0
    %761 = vmatpush1.msra.mxu0 0.0
    %762 = vmatprep.subr.mxu0 0.0
    %763 = vmatpush1.msra.mxu0 0.0
    %764 = vmatprep.subr.mxu0 0.0
    %765 = vmatpush1.msra.mxu0 0.0
    %766 = vmatprep.subr.mxu0 0.0
    %767 = vmatpush1.msra.mxu0 0.0
    %768 = vmatprep.subr.mxu0 0.0
    %769 = vmatpush1.msra.mxu0 0.0
    %770 = vmatprep.subr.mxu0 0.0
    %771 = vmatpush1.msra.mxu0 0.0
    %772 = vmatprep.subr.mxu0 0.0
    %773 = vmatpush1.msra.mxu0 0.0
    %774 = vmatprep.subr.mxu0 0.0
    %775 = vmatpush1.msra.mxu0 0.0
    %776 = vmatprep.subr.mxu0 0.0
    %777 = vmatpush1.msra.mxu0 0.0
    %778 = vmatprep.subr.mxu0 0.0
    %779 = vmatpush1.msra.mxu0 0.0
    %780 = vmatprep.subr.mxu0 0.0
    %781 = vmatpush1.msra.mxu0 0.0
    %782 = vmatprep.subr.mxu0 0.0
    %783 = vmatpush1.msra.mxu0 0.0
    %784 = vmatprep.mubr.f32.mxu0 0.0
    %785 = vmatmul.mubr.f32.gmra.mrb[0].mxu0 %v514
    %v786 = vpop.f32.mrb[0].mxu0
    %v787 = vadd.f32 0.0, %v786
    %v788 = vpop.f32.mrb[0].mxu0
    %789 = vmatprep.mubr.f32.mxu0 0.0
    %790 = vmatmul.mubr.f32.gmra.mrb[0].mxu0 %v517
    %v791 = vpop.f32.mrb[0].mxu0
    %v792 = vadd.f32 0.0, %v791
    %v793 = vpop.f32.mrb[0].mxu0
    %794 = vmatprep.mubr.f32.mxu0 0.0
    %795 = vmatmul.mubr.f32.gmra.mrb[0].mxu0 %v520
    %v796 = vpop.f32.mrb[0].mxu0
    %v797 = vadd.f32 0.0, %v796
    %v798 = vpop.f32.mrb[0].mxu0
    %799 = vmatprep.mubr.f32.mxu0 0.0
    %800 = vmatmul.mubr.f32.gmra.mrb[0].mxu0 %v523
    %v801 = vpop.f32.mrb[0].mxu0
    %v802 = vadd.f32 0.0, %v801
    %v803 = vpop.f32.mrb[0].mxu0
    %804 = vmatprep.mubr.f32.mxu0 0.0
    %805 = vmatmul.mubr.f32.gmra.mrb[0].mxu0 %v526
    %v806 = vpop.f32.mrb[0].mxu0
    %v807 = vadd.f32 0.0, %v806
    %v808 = vpop.f32.mrb[0].mxu0
    %809 = vmatprep.mubr.f32.mxu0 0.0
    %810 = vmatmul.mubr.f32.gmra.mrb[0].mxu0 %v529
    %v811 = vpop.f32.mrb[0].mxu0
    %v812 = vadd.f32 0.0, %v811
    %v813 = vpop.f32.mrb[0].mxu0
    %814 = vmatprep.mubr.f32.mxu0 0.0
    %815 = vmatmul.mubr.f32.gmra.mrb[0].mxu0 %v532
    %v816 = vpop.f32.mrb[0].mxu0
    %v817 = vadd.f32 0.0, %v816
    %v818 = vpop.f32.mrb[0].mxu0
    %819 = vmatprep.mubr.f32.mxu0 0.0
    %820 = vmatmul.mubr.f32.gmra.mrb[0].mxu0 %v535
    %v821 = vpop.f32.mrb[0].mxu0
    %v822 = vadd.f32 0.0, %v821
    %v823 = vpop.f32.mrb[0].mxu0
    %824 = vmatprep.mubr.f32.mxu0 0.0
    %825 = vmatmul.mubr.f32.gmra.mrb[0].mxu0 %v538
    %v826 = vpop.f32.mrb[0].mxu0
    %v827 = vadd.f32 0.0, %v826
    %v828 = vpop.f32.mrb[0].mxu0
    %829 = vmatprep.mubr.f32.mxu0 0.0
    %830 = vmatmul.mubr.f32.gmra.mrb[0].mxu0 %v541
    %v831 = vpop.f32.mrb[0].mxu0
    %v832 = vadd.f32 0.0, %v831
    %v833 = vpop.f32.mrb[0].mxu0
    %834 = vmatprep.mubr.f32.mxu0 0.0
    %835 = vmatmul.mubr.f32.gmra.mrb[0].mxu0 %v544
    %v836 = vpop.f32.mrb[0].mxu0
    %v837 = vadd.f32 0.0, %v836
    %v838 = vpop.f32.mrb[0].mxu0
    %839 = vmatprep.mubr.f32.mxu0 0.0
    %840 = vmatmul.mubr.f32.gmra.mrb[0].mxu0 %v547
    %v841 = vpop.f32.mrb[0].mxu0
    %v842 = vadd.f32 0.0, %v841
    %v843 = vpop.f32.mrb[0].mxu0
    %844 = vmatprep.mubr.f32.mxu0 0.0
    %845 = vmatmul.mubr.f32.gmra.mrb[0].mxu0 %v550
    %v846 = vpop.f32.mrb[0].mxu0
    %v847 = vadd.f32 0.0, %v846
    %v848 = vpop.f32.mrb[0].mxu0
    %849 = vmatprep.mubr.f32.mxu0 0.0
    %850 = vmatmul.mubr.f32.gmra.mrb[0].mxu0 %v553
    %v851 = vpop.f32.mrb[0].mxu0
    %v852 = vadd.f32 0.0, %v851
    %v853 = vpop.f32.mrb[0].mxu0
    %854 = vmatprep.mubr.f32.mxu0 0.0
    %855 = vmatmul.mubr.f32.gmra.mrb[0].mxu0 %v556
    %v856 = vpop.f32.mrb[0].mxu0
    %v857 = vadd.f32 0.0, %v856
    %v858 = vpop.f32.mrb[0].mxu0
    %859 = vmatprep.mubr.f32.mxu0 0.0
    %860 = vmatmul.mubr.f32.gmra.mrb[0].mxu0 %v559
    %v861 = vpop.f32.mrb[0].mxu0
    %v862 = vadd.f32 0.0, %v861
    %v863 = vpop.f32.mrb[0].mxu0
    %864 = vdwg.mxu0
    %v865 = vadd.f32 %v632, %v178
    %v866 = vadd.f32 %v637, %v183
    %v867 = vadd.f32 %v642, %v188
    %v868 = vadd.f32 %v647, %v193
    %v869 = vadd.f32 %v652, %v198
    %v870 = vadd.f32 %v657, %v203
    %v871 = vadd.f32 %v662, %v208
    %v872 = vadd.f32 %v667, %v213
    %v873 = vadd.f32 %v672, %v218
    %v874 = vadd.f32 %v677, %v223
    %v875 = vadd.f32 %v682, %v228
    %v876 = vadd.f32 %v687, %v233
    %v877 = vadd.f32 %v692, %v238
    %v878 = vadd.f32 %v697, %v243
    %v879 = vadd.f32 %v702, %v248
    %v880 = vadd.f32 %v707, %v253
    %v883 = vcombine.high %v341, %v341
    %v885 = vunpack.c.l.s4 1966171168
    %v886 = vunpack.c.0.s8 %v885
    %v887 = vlaneseq
    %v888 = vshrl.u32 %v887, 7
    %v889 = vsub.s32 %v886, %v888
    %v890 = vrot.slane %v341, %v889
    %v892 = vunpack.c.l.s4 1966171168
    %v893 = vunpack.c.0.s8 %v892
    %v894 = vlaneseq
    %v895 = vshrl.u32 %v894, 7
    %v896 = vsub.s32 %v893, %v895
    %v897 = vrot.slane %v883, %v896
    %v898 = vcombine.high %v890, %v890
    %v899 = vcombine.high %v897, %v897
    %v901 = vunpack.c.l.s4 1966171168
    %v902 = vunpack.c.0.s8 %v901
    %v903 = vlaneseq
    %v904 = vshrl.u32 %v903, 7
    %v905 = vsub.s32 %v902, %v904
    %v906 = vrot.slane %v890, %v905
    %v908 = vunpack.c.l.s4 1966171168
    %v909 = vunpack.c.0.s8 %v908
    %v910 = vlaneseq
    %v911 = vshrl.u32 %v910, 7
    %v912 = vsub.s32 %v909, %v911
    %v913 = vrot.slane %v897, %v912
    %v915 = vunpack.c.l.s4 1966171168
    %v916 = vunpack.c.0.s8 %v915
    %v917 = vlaneseq
    %v918 = vshrl.u32 %v917, 7
    %v919 = vsub.s32 %v916, %v918
    %v920 = vrot.slane %v898, %v919
    %v922 = vunpack.c.l.s4 1966171168
    %v923 = vunpack.c.0.s8 %v922
    %v924 = vlaneseq
    %v925 = vshrl.u32 %v924, 7
    %v926 = vsub.s32 %v923, %v925
    %v927 = vrot.slane %v899, %v926
    %v928 = vcombine.high %v906, %v906
    %v929 = vcombine.high %v913, %v913
    %v930 = vcombine.high %v920, %v920
    %v931 = vcombine.high %v927, %v927
    %v932 = vcombine.high %v342, %v342
    %v934 = vunpack.c.l.s4 1966171168
    %v935 = vunpack.c.0.s8 %v934
    %v936 = vlaneseq
    %v937 = vshrl.u32 %v936, 7
    %v938 = vsub.s32 %v935, %v937
    %v939 = vrot.slane %v342, %v938
    %v941 = vunpack.c.l.s4 1966171168
    %v942 = vunpack.c.0.s8 %v941
    %v943 = vlaneseq
    %v944 = vshrl.u32 %v943, 7
    %v945 = vsub.s32 %v942, %v944
    %v946 = vrot.slane %v932, %v945
    %v947 = vcombine.high %v939, %v939
    %v948 = vcombine.high %v946, %v946
    %v950 = vunpack.c.l.s4 1966171168
    %v951 = vunpack.c.0.s8 %v950
    %v952 = vlaneseq
    %v953 = vshrl.u32 %v952, 7
    %v954 = vsub.s32 %v951, %v953
    %v955 = vrot.slane %v939, %v954
    %v957 = vunpack.c.l.s4 1966171168
    %v958 = vunpack.c.0.s8 %v957
    %v959 = vlaneseq
    %v960 = vshrl.u32 %v959, 7
    %v961 = vsub.s32 %v958, %v960
    %v962 = vrot.slane %v946, %v961
    %v964 = vunpack.c.l.s4 1966171168
    %v965 = vunpack.c.0.s8 %v964
    %v966 = vlaneseq
    %v967 = vshrl.u32 %v966, 7
    %v968 = vsub.s32 %v965, %v967
    %v969 = vrot.slane %v947, %v968
    %v971 = vunpack.c.l.s4 1966171168
    %v972 = vunpack.c.0.s8 %v971
    %v973 = vlaneseq
    %v974 = vshrl.u32 %v973, 7
    %v975 = vsub.s32 %v972, %v974
    %v976 = vrot.slane %v948, %v975
    %v977 = vcombine.high %v955, %v955
    %v978 = vcombine.high %v962, %v962
    %v979 = vcombine.high %v969, %v969
    %v980 = vcombine.high %v976, %v976
    %v981 = vlaneseq
    %v982 = vshrl.u32 %v981, 7
    %v983 = vsub.s32 0, %v982
    %v984 = vrot.slane %v906, %v983
    %v985 = vlaneseq
    %v986 = vshrl.u32 %v985, 7
    %v987 = vsub.s32 0, %v986
    %v988 = vrot.slane %v920, %v987
    %v989 = vlaneseq
    %v990 = vshrl.u32 %v989, 7
    %v991 = vsub.s32 0, %v990
    %v992 = vrot.slane %v928, %v991
    %v993 = vlaneseq
    %v994 = vshrl.u32 %v993, 7
    %v995 = vsub.s32 0, %v994
    %v996 = vrot.slane %v930, %v995
    %v997 = vlaneseq
    %v998 = vshrl.u32 %v997, 7
    %v999 = vsub.s32 0, %v998
    %v1000 = vrot.slane %v913, %v999
    %v1001 = vlaneseq
    %v1002 = vshrl.u32 %v1001, 7
    %v1003 = vsub.s32 0, %v1002
    %v1004 = vrot.slane %v927, %v1003
    %v1005 = vlaneseq
    %v1006 = vshrl.u32 %v1005, 7
    %v1007 = vsub.s32 0, %v1006
    %v1008 = vrot.slane %v929, %v1007
    %v1009 = vlaneseq
    %v1010 = vshrl.u32 %v1009, 7
    %v1011 = vsub.s32 0, %v1010
    %v1012 = vrot.slane %v931, %v1011
    %v1013 = vlaneseq
    %v1014 = vshrl.u32 %v1013, 7
    %v1015 = vsub.s32 0, %v1014
    %v1016 = vrot.slane %v955, %v1015
    %v1017 = vlaneseq
    %v1018 = vshrl.u32 %v1017, 7
    %v1019 = vsub.s32 0, %v1018
    %v1020 = vrot.slane %v969, %v1019
    %v1021 = vlaneseq
    %v1022 = vshrl.u32 %v1021, 7
    %v1023 = vsub.s32 0, %v1022
    %v1024 = vrot.slane %v977, %v1023
    %v1025 = vlaneseq
    %v1026 = vshrl.u32 %v1025, 7
    %v1027 = vsub.s32 0, %v1026
    %v1028 = vrot.slane %v979, %v1027
    %v1029 = vlaneseq
    %v1030 = vshrl.u32 %v1029, 7
    %v1031 = vsub.s32 0, %v1030
    %v1032 = vrot.slane %v962, %v1031
    %v1033 = vlaneseq
    %v1034 = vshrl.u32 %v1033, 7
    %v1035 = vsub.s32 0, %v1034
    %v1036 = vrot.slane %v976, %v1035
    %v1037 = vlaneseq
    %v1038 = vshrl.u32 %v1037, 7
    %v1039 = vsub.s32 0, %v1038
    %v1040 = vrot.slane %v978, %v1039
    %v1041 = vlaneseq
    %v1042 = vshrl.u32 %v1041, 7
    %v1043 = vsub.s32 0, %v1042
    %v1044 = vrot.slane %v980, %v1043
    %v1061 = vmul.f32 %v865, %v984
    %v1062 = vmul.f32 %v866, %v988
    %v1063 = vmul.f32 %v867, %v992
    %v1064 = vmul.f32 %v868, %v996
    %v1065 = vmul.f32 %v869, %v1000
    %v1066 = vmul.f32 %v870, %v1004
    %v1067 = vmul.f32 %v871, %v1008
    %v1068 = vmul.f32 %v872, %v1012
    %v1069 = vmul.f32 %v873, %v1016
    %v1070 = vmul.f32 %v874, %v1020
    %v1071 = vmul.f32 %v875, %v1024
    %v1072 = vmul.f32 %v876, %v1028
    %v1073 = vmul.f32 %v877, %v1032
    %v1074 = vmul.f32 %v878, %v1036
    %v1075 = vmul.f32 %v879, %v1040
    %v1076 = vmul.f32 %v880, %v1044
    %v1077 = vsel %vm62, %v1061, 0.0
    %1078 = vadd.xlane.f32.xlu0 %v1077
    %v1079 = vpop.xlane.xlu0 %1078
    %v1080 = vsel %vm62, %v1062, 0.0
    %1081 = vadd.xlane.f32.xlu0 %v1080
    %v1082 = vpop.xlane.xlu0 %1081
    %v1083 = vsel %vm62, %v1063, 0.0
    %1084 = vadd.xlane.f32.xlu0 %v1083
    %v1085 = vpop.xlane.xlu0 %1084
    %v1086 = vsel %vm62, %v1064, 0.0
    %1087 = vadd.xlane.f32.xlu0 %v1086
    %v1088 = vpop.xlane.xlu0 %1087
    %v1089 = vsel %vm62, %v1065, 0.0
    %1090 = vadd.xlane.f32.xlu0 %v1089
    %v1091 = vpop.xlane.xlu0 %1090
    %v1092 = vsel %vm62, %v1066, 0.0
    %1093 = vadd.xlane.f32.xlu0 %v1092
    %v1094 = vpop.xlane.xlu0 %1093
    %v1095 = vsel %vm62, %v1067, 0.0
    %1096 = vadd.xlane.f32.xlu0 %v1095
    %v1097 = vpop.xlane.xlu0 %1096
    %v1098 = vsel %vm62, %v1068, 0.0
    %1099 = vadd.xlane.f32.xlu0 %v1098
    %v1100 = vpop.xlane.xlu0 %1099
    %v1101 = vsel %vm62, %v1069, 0.0
    %1102 = vadd.xlane.f32.xlu0 %v1101
    %v1103 = vpop.xlane.xlu0 %1102
    %v1104 = vsel %vm62, %v1070, 0.0
    %1105 = vadd.xlane.f32.xlu0 %v1104
    %v1106 = vpop.xlane.xlu0 %1105
    %v1107 = vsel %vm62, %v1071, 0.0
    %1108 = vadd.xlane.f32.xlu0 %v1107
    %v1109 = vpop.xlane.xlu0 %1108
    %v1110 = vsel %vm62, %v1072, 0.0
    %1111 = vadd.xlane.f32.xlu0 %v1110
    %v1112 = vpop.xlane.xlu0 %1111
    %v1113 = vsel %vm62, %v1073, 0.0
    %1114 = vadd.xlane.f32.xlu0 %v1113
    %v1115 = vpop.xlane.xlu0 %1114
    %v1116 = vsel %vm62, %v1074, 0.0
    %1117 = vadd.xlane.f32.xlu0 %v1116
    %v1118 = vpop.xlane.xlu0 %1117
    %v1119 = vsel %vm62, %v1075, 0.0
    %1120 = vadd.xlane.f32.xlu0 %v1119
    %v1121 = vpop.xlane.xlu0 %1120
    %v1122 = vsel %vm62, %v1076, 0.0
    %1123 = vadd.xlane.f32.xlu0 %v1122
    %v1124 = vpop.xlane.xlu0 %1123
    %v1141 = vlaneseq
    %v1142 = vshrl.u32 %v1141, 7
    %v1143 = vsub.s32 %v344, %v1142
    %v1144 = vrot.slane %v1079, %v1143
    %v1145 = vlaneseq
    %v1146 = vshrl.u32 %v1145, 7
    %v1147 = vsub.s32 %v344, %v1146
    %v1148 = vrot.slane %v1082, %v1147
    %v1149 = vlaneseq
    %v1150 = vshrl.u32 %v1149, 7
    %v1151 = vsub.s32 %v344, %v1150
    %v1152 = vrot.slane %v1085, %v1151
    %v1153 = vlaneseq
    %v1154 = vshrl.u32 %v1153, 7
    %v1155 = vsub.s32 %v344, %v1154
    %v1156 = vrot.slane %v1088, %v1155
    %v1157 = vlaneseq
    %v1158 = vshrl.u32 %v1157, 7
    %v1159 = vsub.s32 %v344, %v1158
    %v1160 = vrot.slane %v1091, %v1159
    %v1161 = vlaneseq
    %v1162 = vshrl.u32 %v1161, 7
    %v1163 = vsub.s32 %v344, %v1162
    %v1164 = vrot.slane %v1094, %v1163
    %v1165 = vlaneseq
    %v1166 = vshrl.u32 %v1165, 7
    %v1167 = vsub.s32 %v344, %v1166
    %v1168 = vrot.slane %v1097, %v1167
    %v1169 = vlaneseq
    %v1170 = vshrl.u32 %v1169, 7
    %v1171 = vsub.s32 %v344, %v1170
    %v1172 = vrot.slane %v1100, %v1171
    %v1173 = vlaneseq
    %v1174 = vshrl.u32 %v1173, 7
    %v1175 = vsub.s32 %v344, %v1174
    %v1176 = vrot.slane %v1103, %v1175
    %v1177 = vlaneseq
    %v1178 = vshrl.u32 %v1177, 7
    %v1179 = vsub.s32 %v344, %v1178
    %v1180 = vrot.slane %v1106, %v1179
    %v1181 = vlaneseq
    %v1182 = vshrl.u32 %v1181, 7
    %v1183 = vsub.s32 %v344, %v1182
    %v1184 = vrot.slane %v1109, %v1183
    %v1185 = vlaneseq
    %v1186 = vshrl.u32 %v1185, 7
    %v1187 = vsub.s32 %v344, %v1186
    %v1188 = vrot.slane %v1112, %v1187
    %v1189 = vlaneseq
    %v1190 = vshrl.u32 %v1189, 7
    %v1191 = vsub.s32 %v344, %v1190
    %v1192 = vrot.slane %v1115, %v1191
    %v1193 = vlaneseq
    %v1194 = vshrl.u32 %v1193, 7
    %v1195 = vsub.s32 %v344, %v1194
    %v1196 = vrot.slane %v1118, %v1195
    %v1197 = vlaneseq
    %v1198 = vshrl.u32 %v1197, 7
    %v1199 = vsub.s32 %v344, %v1198
    %v1200 = vrot.slane %v1121, %v1199
    %v1201 = vlaneseq
    %v1202 = vshrl.u32 %v1201, 7
    %v1203 = vsub.s32 %v344, %v1202
    %v1204 = vrot.slane %v1124, %v1203
    %vm1205 = vcmask 1041409
    %v1206 = vsel %vm1205, %v1148, %v1144
    %vm1207 = vcmask 1042434
    %v1208 = vsel %vm1207, %v1152, %v1206
    %vm1209 = vcmask 1043459
    %v1210 = vsel %vm1209, %v1156, %v1208
    %vm1211 = vcmask 1044484
    %v1212 = vsel %vm1211, %v1160, %v1210
    %vm1213 = vcmask 1045509
    %v1214 = vsel %vm1213, %v1164, %v1212
    %vm1215 = vcmask 1046534
    %v1216 = vsel %vm1215, %v1168, %v1214
    %vm1217 = vcmask 1047559
    %v1218 = vsel %vm1217, %v1172, %v1216
    %v1219 = vsel %vm1205, %v1180, %v1176
    %v1220 = vsel %vm1207, %v1184, %v1219
    %v1221 = vsel %vm1209, %v1188, %v1220
    %v1222 = vsel %vm1211, %v1192, %v1221
    %v1223 = vsel %vm1213, %v1196, %v1222
    %v1224 = vsel %vm1215, %v1200, %v1223
    %v1225 = vsel %vm1217, %v1204, %v1224
    %vm1228 = vcmask 64512
    %v1229 = vsel %vm1228, %v1218, -inf
    %1230 = vmax.xlane.f32.xlu0 %v1229
    %v1231 = vpop.xlane.xlu0 %1230
    %v1232 = vsel %vm1228, %v1225, -inf
    %1233 = vmax.xlane.f32.xlu0 %v1232
    %v1234 = vpop.xlane.xlu0 %1233
    %v1237 = vlaneseq
    %v1238 = vshrl.u32 %v1237, 7
    %v1239 = vsub.s32 0, %v1238
    %v1240 = vrot.slane %v1231, %v1239
    %v1241 = vlaneseq
    %v1242 = vshrl.u32 %v1241, 7
    %v1243 = vsub.s32 1, %v1242
    %v1244 = vrot.slane %v1231, %v1243
    %v1245 = vlaneseq
    %v1246 = vshrl.u32 %v1245, 7
    %v1247 = vsub.s32 2, %v1246
    %v1248 = vrot.slane %v1231, %v1247
    %v1249 = vlaneseq
    %v1250 = vshrl.u32 %v1249, 7
    %v1251 = vsub.s32 3, %v1250
    %v1252 = vrot.slane %v1231, %v1251
    %v1253 = vlaneseq
    %v1254 = vshrl.u32 %v1253, 7
    %v1255 = vsub.s32 4, %v1254
    %v1256 = vrot.slane %v1231, %v1255
    %v1257 = vlaneseq
    %v1258 = vshrl.u32 %v1257, 7
    %v1259 = vsub.s32 5, %v1258
    %v1260 = vrot.slane %v1231, %v1259
    %v1261 = vlaneseq
    %v1262 = vshrl.u32 %v1261, 7
    %v1263 = vsub.s32 6, %v1262
    %v1264 = vrot.slane %v1231, %v1263
    %v1265 = vlaneseq
    %v1266 = vshrl.u32 %v1265, 7
    %v1267 = vsub.s32 7, %v1266
    %v1268 = vrot.slane %v1231, %v1267
    %v1269 = vlaneseq
    %v1270 = vshrl.u32 %v1269, 7
    %v1271 = vsub.s32 0, %v1270
    %v1272 = vrot.slane %v1234, %v1271
    %v1273 = vlaneseq
    %v1274 = vshrl.u32 %v1273, 7
    %v1275 = vsub.s32 1, %v1274
    %v1276 = vrot.slane %v1234, %v1275
    %v1277 = vlaneseq
    %v1278 = vshrl.u32 %v1277, 7
    %v1279 = vsub.s32 2, %v1278
    %v1280 = vrot.slane %v1234, %v1279
    %v1281 = vlaneseq
    %v1282 = vshrl.u32 %v1281, 7
    %v1283 = vsub.s32 3, %v1282
    %v1284 = vrot.slane %v1234, %v1283
    %v1285 = vlaneseq
    %v1286 = vshrl.u32 %v1285, 7
    %v1287 = vsub.s32 4, %v1286
    %v1288 = vrot.slane %v1234, %v1287
    %v1289 = vlaneseq
    %v1290 = vshrl.u32 %v1289, 7
    %v1291 = vsub.s32 5, %v1290
    %v1292 = vrot.slane %v1234, %v1291
    %v1293 = vlaneseq
    %v1294 = vshrl.u32 %v1293, 7
    %v1295 = vsub.s32 6, %v1294
    %v1296 = vrot.slane %v1234, %v1295
    %v1297 = vlaneseq
    %v1298 = vshrl.u32 %v1297, 7
    %v1299 = vsub.s32 7, %v1298
    %v1300 = vrot.slane %v1234, %v1299
    %v1317 = vsub.f32 %v1079, %v1240
    %v1318 = vsub.f32 %v1082, %v1244
    %v1319 = vsub.f32 %v1085, %v1248
    %v1320 = vsub.f32 %v1088, %v1252
    %v1321 = vsub.f32 %v1091, %v1256
    %v1322 = vsub.f32 %v1094, %v1260
    %v1323 = vsub.f32 %v1097, %v1264
    %v1324 = vsub.f32 %v1100, %v1268
    %v1325 = vsub.f32 %v1103, %v1272
    %v1326 = vsub.f32 %v1106, %v1276
    %v1327 = vsub.f32 %v1109, %v1280
    %v1328 = vsub.f32 %v1112, %v1284
    %v1329 = vsub.f32 %v1115, %v1288
    %v1330 = vsub.f32 %v1118, %v1292
    %v1331 = vsub.f32 %v1121, %v1296
    %v1332 = vsub.f32 %v1124, %v1300
    %v1333 = vmul.f32 %v1317, 1.442695
    %v1334 = vpow.pop %v1333
    %v1335 = vmul.f32 %v1318, 1.442695
    %v1336 = vpow.pop %v1335
    %v1337 = vmul.f32 %v1319, 1.442695
    %v1338 = vpow.pop %v1337
    %v1339 = vmul.f32 %v1320, 1.442695
    %v1340 = vpow.pop %v1339
    %v1341 = vmul.f32 %v1321, 1.442695
    %v1342 = vpow.pop %v1341
    %v1343 = vmul.f32 %v1322, 1.442695
    %v1344 = vpow.pop %v1343
    %v1345 = vmul.f32 %v1323, 1.442695
    %v1346 = vpow.pop %v1345
    %v1347 = vmul.f32 %v1324, 1.442695
    %v1348 = vpow.pop %v1347
    %v1349 = vmul.f32 %v1325, 1.442695
    %v1350 = vpow.pop %v1349
    %v1351 = vmul.f32 %v1326, 1.442695
    %v1352 = vpow.pop %v1351
    %v1353 = vmul.f32 %v1327, 1.442695
    %v1354 = vpow.pop %v1353
    %v1355 = vmul.f32 %v1328, 1.442695
    %v1356 = vpow.pop %v1355
    %v1357 = vmul.f32 %v1329, 1.442695
    %v1358 = vpow.pop %v1357
    %v1359 = vmul.f32 %v1330, 1.442695
    %v1360 = vpow.pop %v1359
    %v1361 = vmul.f32 %v1331, 1.442695
    %v1362 = vpow.pop %v1361
    %v1363 = vmul.f32 %v1332, 1.442695
    %v1364 = vpow.pop %v1363
    %1381 = vset.pattern.permute.xlu0 0
    %1382 = vperm.xlu0 %1381, %v1334
    %v1383 = vpop.permute.xlu0 %1382
    %1384 = vset.pattern.permute.xlu0 0
    %1385 = vperm.xlu0 %1384, %v1336
    %v1386 = vpop.permute.xlu0 %1385
    %1387 = vset.pattern.permute.xlu0 0
    %1388 = vperm.xlu0 %1387, %v1338
    %v1389 = vpop.permute.xlu0 %1388
    %1390 = vset.pattern.permute.xlu0 0
    %1391 = vperm.xlu0 %1390, %v1340
    %v1392 = vpop.permute.xlu0 %1391
    %1393 = vset.pattern.permute.xlu0 0
    %1394 = vperm.xlu0 %1393, %v1342
    %v1395 = vpop.permute.xlu0 %1394
    %1396 = vset.pattern.permute.xlu0 0
    %1397 = vperm.xlu0 %1396, %v1344
    %v1398 = vpop.permute.xlu0 %1397
    %1399 = vset.pattern.permute.xlu0 0
    %1400 = vperm.xlu0 %1399, %v1346
    %v1401 = vpop.permute.xlu0 %1400
    %1402 = vset.pattern.permute.xlu0 0
    %1403 = vperm.xlu0 %1402, %v1348
    %v1404 = vpop.permute.xlu0 %1403
    %1405 = vset.pattern.permute.xlu0 0
    %1406 = vperm.xlu0 %1405, %v1350
    %v1407 = vpop.permute.xlu0 %1406
    %1408 = vset.pattern.permute.xlu0 0
    %1409 = vperm.xlu0 %1408, %v1352
    %v1410 = vpop.permute.xlu0 %1409
    %1411 = vset.pattern.permute.xlu0 0
    %1412 = vperm.xlu0 %1411, %v1354
    %v1413 = vpop.permute.xlu0 %1412
    %1414 = vset.pattern.permute.xlu0 0
    %1415 = vperm.xlu0 %1414, %v1356
    %v1416 = vpop.permute.xlu0 %1415
    %1417 = vset.pattern.permute.xlu0 0
    %1418 = vperm.xlu0 %1417, %v1358
    %v1419 = vpop.permute.xlu0 %1418
    %1420 = vset.pattern.permute.xlu0 0
    %1421 = vperm.xlu0 %1420, %v1360
    %v1422 = vpop.permute.xlu0 %1421
    %1423 = vset.pattern.permute.xlu0 0
    %1424 = vperm.xlu0 %1423, %v1362
    %v1425 = vpop.permute.xlu0 %1424
    %1426 = vset.pattern.permute.xlu0 0
    %1427 = vperm.xlu0 %1426, %v1364
    %v1428 = vpop.permute.xlu0 %1427
    %v1429 = vlaneseq
    %v1430 = vshrl.u32 %v1429, 7
    %v1431 = vsub.s32 %v344, %v1430
    %v1432 = vrot.slane %v1383, %v1431
    %v1433 = vlaneseq
    %v1434 = vshrl.u32 %v1433, 7
    %v1435 = vsub.s32 %v344, %v1434
    %v1436 = vrot.slane %v1386, %v1435
    %v1437 = vlaneseq
    %v1438 = vshrl.u32 %v1437, 7
    %v1439 = vsub.s32 %v344, %v1438
    %v1440 = vrot.slane %v1389, %v1439
    %v1441 = vlaneseq
    %v1442 = vshrl.u32 %v1441, 7
    %v1443 = vsub.s32 %v344, %v1442
    %v1444 = vrot.slane %v1392, %v1443
    %v1445 = vlaneseq
    %v1446 = vshrl.u32 %v1445, 7
    %v1447 = vsub.s32 %v344, %v1446
    %v1448 = vrot.slane %v1395, %v1447
    %v1449 = vlaneseq
    %v1450 = vshrl.u32 %v1449, 7
    %v1451 = vsub.s32 %v344, %v1450
    %v1452 = vrot.slane %v1398, %v1451
    %v1453 = vlaneseq
    %v1454 = vshrl.u32 %v1453, 7
    %v1455 = vsub.s32 %v344, %v1454
    %v1456 = vrot.slane %v1401, %v1455
    %v1457 = vlaneseq
    %v1458 = vshrl.u32 %v1457, 7
    %v1459 = vsub.s32 %v344, %v1458
    %v1460 = vrot.slane %v1404, %v1459
    %v1461 = vlaneseq
    %v1462 = vshrl.u32 %v1461, 7
    %v1463 = vsub.s32 %v344, %v1462
    %v1464 = vrot.slane %v1407, %v1463
    %v1465 = vlaneseq
    %v1466 = vshrl.u32 %v1465, 7
    %v1467 = vsub.s32 %v344, %v1466
    %v1468 = vrot.slane %v1410, %v1467
    %v1469 = vlaneseq
    %v1470 = vshrl.u32 %v1469, 7
    %v1471 = vsub.s32 %v344, %v1470
    %v1472 = vrot.slane %v1413, %v1471
    %v1473 = vlaneseq
    %v1474 = vshrl.u32 %v1473, 7
    %v1475 = vsub.s32 %v344, %v1474
    %v1476 = vrot.slane %v1416, %v1475
    %v1477 = vlaneseq
    %v1478 = vshrl.u32 %v1477, 7
    %v1479 = vsub.s32 %v344, %v1478
    %v1480 = vrot.slane %v1419, %v1479
    %v1481 = vlaneseq
    %v1482 = vshrl.u32 %v1481, 7
    %v1483 = vsub.s32 %v344, %v1482
    %v1484 = vrot.slane %v1422, %v1483
    %v1485 = vlaneseq
    %v1486 = vshrl.u32 %v1485, 7
    %v1487 = vsub.s32 %v344, %v1486
    %v1488 = vrot.slane %v1425, %v1487
    %v1489 = vlaneseq
    %v1490 = vshrl.u32 %v1489, 7
    %v1491 = vsub.s32 %v344, %v1490
    %v1492 = vrot.slane %v1428, %v1491
    %v1493 = vsel %vm1205, %v1436, %v1432
    %v1494 = vsel %vm1207, %v1440, %v1493
    %v1495 = vsel %vm1209, %v1444, %v1494
    %v1496 = vsel %vm1211, %v1448, %v1495
    %v1497 = vsel %vm1213, %v1452, %v1496
    %v1498 = vsel %vm1215, %v1456, %v1497
    %v1499 = vsel %vm1217, %v1460, %v1498
    %v1500 = vsel %vm1205, %v1468, %v1464
    %v1501 = vsel %vm1207, %v1472, %v1500
    %v1502 = vsel %vm1209, %v1476, %v1501
    %v1503 = vsel %vm1211, %v1480, %v1502
    %v1504 = vsel %vm1213, %v1484, %v1503
    %v1505 = vsel %vm1215, %v1488, %v1504
    %v1506 = vsel %vm1217, %v1492, %v1505
    %v1509 = vsel %vm1228, %v1499, 0.0
    %1510 = vadd.xlane.f32.xlu0 %v1509
    %v1511 = vpop.xlane.xlu0 %1510
    %v1512 = vsel %vm1228, %v1506, 0.0
    %1513 = vadd.xlane.f32.xlu0 %v1512
    %v1514 = vpop.xlane.xlu0 %1513
    %v1515 = vrcp.pop %v1511
    %v1516 = vrcp.pop %v1514
    %v1519 = vlaneseq
    %v1520 = vshrl.u32 %v1519, 7
    %v1521 = vsub.s32 0, %v1520
    %v1522 = vrot.slane %v1515, %v1521
    %v1523 = vlaneseq
    %v1524 = vshrl.u32 %v1523, 7
    %v1525 = vsub.s32 1, %v1524
    %v1526 = vrot.slane %v1515, %v1525
    %v1527 = vlaneseq
    %v1528 = vshrl.u32 %v1527, 7
    %v1529 = vsub.s32 2, %v1528
    %v1530 = vrot.slane %v1515, %v1529
    %v1531 = vlaneseq
    %v1532 = vshrl.u32 %v1531, 7
    %v1533 = vsub.s32 3, %v1532
    %v1534 = vrot.slane %v1515, %v1533
    %v1535 = vlaneseq
    %v1536 = vshrl.u32 %v1535, 7
    %v1537 = vsub.s32 4, %v1536
    %v1538 = vrot.slane %v1515, %v1537
    %v1539 = vlaneseq
    %v1540 = vshrl.u32 %v1539, 7
    %v1541 = vsub.s32 5, %v1540
    %v1542 = vrot.slane %v1515, %v1541
    %v1543 = vlaneseq
    %v1544 = vshrl.u32 %v1543, 7
    %v1545 = vsub.s32 6, %v1544
    %v1546 = vrot.slane %v1515, %v1545
    %v1547 = vlaneseq
    %v1548 = vshrl.u32 %v1547, 7
    %v1549 = vsub.s32 7, %v1548
    %v1550 = vrot.slane %v1515, %v1549
    %v1551 = vlaneseq
    %v1552 = vshrl.u32 %v1551, 7
    %v1553 = vsub.s32 0, %v1552
    %v1554 = vrot.slane %v1516, %v1553
    %v1555 = vlaneseq
    %v1556 = vshrl.u32 %v1555, 7
    %v1557 = vsub.s32 1, %v1556
    %v1558 = vrot.slane %v1516, %v1557
    %v1559 = vlaneseq
    %v1560 = vshrl.u32 %v1559, 7
    %v1561 = vsub.s32 2, %v1560
    %v1562 = vrot.slane %v1516, %v1561
    %v1563 = vlaneseq
    %v1564 = vshrl.u32 %v1563, 7
    %v1565 = vsub.s32 3, %v1564
    %v1566 = vrot.slane %v1516, %v1565
    %v1567 = vlaneseq
    %v1568 = vshrl.u32 %v1567, 7
    %v1569 = vsub.s32 4, %v1568
    %v1570 = vrot.slane %v1516, %v1569
    %v1571 = vlaneseq
    %v1572 = vshrl.u32 %v1571, 7
    %v1573 = vsub.s32 5, %v1572
    %v1574 = vrot.slane %v1516, %v1573
    %v1575 = vlaneseq
    %v1576 = vshrl.u32 %v1575, 7
    %v1577 = vsub.s32 6, %v1576
    %v1578 = vrot.slane %v1516, %v1577
    %v1579 = vlaneseq
    %v1580 = vshrl.u32 %v1579, 7
    %v1581 = vsub.s32 7, %v1580
    %v1582 = vrot.slane %v1516, %v1581
    %v1599 = vmul.f32 %v1334, %v1522
    %v1600 = vmul.f32 %v1336, %v1526
    %v1601 = vmul.f32 %v1338, %v1530
    %v1602 = vmul.f32 %v1340, %v1534
    %v1603 = vmul.f32 %v1342, %v1538
    %v1604 = vmul.f32 %v1344, %v1542
    %v1605 = vmul.f32 %v1346, %v1546
    %v1606 = vmul.f32 %v1348, %v1550
    %v1607 = vmul.f32 %v1350, %v1554
    %v1608 = vmul.f32 %v1352, %v1558
    %v1609 = vmul.f32 %v1354, %v1562
    %v1610 = vmul.f32 %v1356, %v1566
    %v1611 = vmul.f32 %v1358, %v1570
    %v1612 = vmul.f32 %v1360, %v1574
    %v1613 = vmul.f32 %v1362, %v1578
    %v1614 = vmul.f32 %v1364, %v1582
    %v1615 = vadd.f32 %v178, %v787
    %v1616 = vadd.f32 %v183, %v792
    %v1617 = vadd.f32 %v188, %v797
    %v1618 = vadd.f32 %v193, %v802
    %v1619 = vadd.f32 %v198, %v807
    %v1620 = vadd.f32 %v203, %v812
    %v1621 = vadd.f32 %v208, %v817
    %v1622 = vadd.f32 %v213, %v822
    %v1623 = vadd.f32 %v218, %v827
    %v1624 = vadd.f32 %v223, %v832
    %v1625 = vadd.f32 %v228, %v837
    %v1626 = vadd.f32 %v233, %v842
    %v1627 = vadd.f32 %v238, %v847
    %v1628 = vadd.f32 %v243, %v852
    %v1629 = vadd.f32 %v248, %v857
    %v1630 = vadd.f32 %v253, %v862
    %1632 = vset.pattern.permute.xlu0 0
    %1633 = vperm.xlu0 %1632, %v1599
    %v1634 = vpop.permute.xlu0 %1633
    %1637 = vset.pattern.permute.xlu0 0
    %1638 = vperm.xlu0 %1637, %v1600
    %v1639 = vpop.permute.xlu0 %1638
    %1642 = vset.pattern.permute.xlu0 0
    %1643 = vperm.xlu0 %1642, %v1601
    %v1644 = vpop.permute.xlu0 %1643
    %1647 = vset.pattern.permute.xlu0 0
    %1648 = vperm.xlu0 %1647, %v1602
    %v1649 = vpop.permute.xlu0 %1648
    %1652 = vset.pattern.permute.xlu0 0
    %1653 = vperm.xlu0 %1652, %v1603
    %v1654 = vpop.permute.xlu0 %1653
    %1657 = vset.pattern.permute.xlu0 0
    %1658 = vperm.xlu0 %1657, %v1604
    %v1659 = vpop.permute.xlu0 %1658
    %1662 = vset.pattern.permute.xlu0 0
    %1663 = vperm.xlu0 %1662, %v1605
    %v1664 = vpop.permute.xlu0 %1663
    %1667 = vset.pattern.permute.xlu0 0
    %1668 = vperm.xlu0 %1667, %v1606
    %v1669 = vpop.permute.xlu0 %1668
    %1672 = vset.pattern.permute.xlu0 0
    %1673 = vperm.xlu0 %1672, %v1607
    %v1674 = vpop.permute.xlu0 %1673
    %1677 = vset.pattern.permute.xlu0 0
    %1678 = vperm.xlu0 %1677, %v1608
    %v1679 = vpop.permute.xlu0 %1678
    %1682 = vset.pattern.permute.xlu0 0
    %1683 = vperm.xlu0 %1682, %v1609
    %v1684 = vpop.permute.xlu0 %1683
    %1687 = vset.pattern.permute.xlu0 0
    %1688 = vperm.xlu0 %1687, %v1610
    %v1689 = vpop.permute.xlu0 %1688
    %1692 = vset.pattern.permute.xlu0 0
    %1693 = vperm.xlu0 %1692, %v1611
    %v1694 = vpop.permute.xlu0 %1693
    %1697 = vset.pattern.permute.xlu0 0
    %1698 = vperm.xlu0 %1697, %v1612
    %v1699 = vpop.permute.xlu0 %1698
    %1702 = vset.pattern.permute.xlu0 0
    %1703 = vperm.xlu0 %1702, %v1613
    %v1704 = vpop.permute.xlu0 %1703
    %1707 = vset.pattern.permute.xlu0 0
    %1708 = vperm.xlu0 %1707, %v1614
    %v1709 = vpop.permute.xlu0 %1708
    %v1711 = vmul.f32 %v1634, %v1615
    %v1712 = vmul.f32 %v1639, %v1616
    %v1713 = vmul.f32 %v1644, %v1617
    %v1714 = vmul.f32 %v1649, %v1618
    %v1715 = vmul.f32 %v1654, %v1619
    %v1716 = vmul.f32 %v1659, %v1620
    %v1717 = vmul.f32 %v1664, %v1621
    %v1718 = vmul.f32 %v1669, %v1622
    %v1719 = vmul.f32 %v1674, %v1623
    %v1720 = vmul.f32 %v1679, %v1624
    %v1721 = vmul.f32 %v1684, %v1625
    %v1722 = vmul.f32 %v1689, %v1626
    %v1723 = vmul.f32 %v1694, %v1627
    %v1724 = vmul.f32 %v1699, %v1628
    %v1725 = vmul.f32 %v1704, %v1629
    %v1726 = vmul.f32 %v1709, %v1630
    %v1727 = vsel %vm62, %v1711, 0.0
    %v1728 = vrot.slane %v1727, 4
    %v1729 = vadd.f32 %v1727, %v1728
    %v1730 = vrot.slane %v1729, 2
    %v1731 = vadd.f32 %v1729, %v1730
    %v1732 = vrot.slane %v1731, 1
    %v1733 = vadd.f32 %v1731, %v1732
    %v1734 = vsel %vm62, %v1712, 0.0
    %v1735 = vrot.slane %v1734, 4
    %v1736 = vadd.f32 %v1734, %v1735
    %v1737 = vrot.slane %v1736, 2
    %v1738 = vadd.f32 %v1736, %v1737
    %v1739 = vrot.slane %v1738, 1
    %v1740 = vadd.f32 %v1738, %v1739
    %v1741 = vsel %vm62, %v1713, 0.0
    %v1742 = vrot.slane %v1741, 4
    %v1743 = vadd.f32 %v1741, %v1742
    %v1744 = vrot.slane %v1743, 2
    %v1745 = vadd.f32 %v1743, %v1744
    %v1746 = vrot.slane %v1745, 1
    %v1747 = vadd.f32 %v1745, %v1746
    %v1748 = vsel %vm62, %v1714, 0.0
    %v1749 = vrot.slane %v1748, 4
    %v1750 = vadd.f32 %v1748, %v1749
    %v1751 = vrot.slane %v1750, 2
    %v1752 = vadd.f32 %v1750, %v1751
    %v1753 = vrot.slane %v1752, 1
    %v1754 = vadd.f32 %v1752, %v1753
    %v1755 = vsel %vm62, %v1715, 0.0
    %v1756 = vrot.slane %v1755, 4
    %v1757 = vadd.f32 %v1755, %v1756
    %v1758 = vrot.slane %v1757, 2
    %v1759 = vadd.f32 %v1757, %v1758
    %v1760 = vrot.slane %v1759, 1
    %v1761 = vadd.f32 %v1759, %v1760
    %v1762 = vsel %vm62, %v1716, 0.0
    %v1763 = vrot.slane %v1762, 4
    %v1764 = vadd.f32 %v1762, %v1763
    %v1765 = vrot.slane %v1764, 2
    %v1766 = vadd.f32 %v1764, %v1765
    %v1767 = vrot.slane %v1766, 1
    %v1768 = vadd.f32 %v1766, %v1767
    %v1769 = vsel %vm62, %v1717, 0.0
    %v1770 = vrot.slane %v1769, 4
    %v1771 = vadd.f32 %v1769, %v1770
    %v1772 = vrot.slane %v1771, 2
    %v1773 = vadd.f32 %v1771, %v1772
    %v1774 = vrot.slane %v1773, 1
    %v1775 = vadd.f32 %v1773, %v1774
    %v1776 = vsel %vm62, %v1718, 0.0
    %v1777 = vrot.slane %v1776, 4
    %v1778 = vadd.f32 %v1776, %v1777
    %v1779 = vrot.slane %v1778, 2
    %v1780 = vadd.f32 %v1778, %v1779
    %v1781 = vrot.slane %v1780, 1
    %v1782 = vadd.f32 %v1780, %v1781
    %v1783 = vsel %vm62, %v1719, 0.0
    %v1784 = vrot.slane %v1783, 4
    %v1785 = vadd.f32 %v1783, %v1784
    %v1786 = vrot.slane %v1785, 2
    %v1787 = vadd.f32 %v1785, %v1786
    %v1788 = vrot.slane %v1787, 1
    %v1789 = vadd.f32 %v1787, %v1788
    %v1790 = vsel %vm62, %v1720, 0.0
    %v1791 = vrot.slane %v1790, 4
    %v1792 = vadd.f32 %v1790, %v1791
    %v1793 = vrot.slane %v1792, 2
    %v1794 = vadd.f32 %v1792, %v1793
    %v1795 = vrot.slane %v1794, 1
    %v1796 = vadd.f32 %v1794, %v1795
    %v1797 = vsel %vm62, %v1721, 0.0
    %v1798 = vrot.slane %v1797, 4
    %v1799 = vadd.f32 %v1797, %v1798
    %v1800 = vrot.slane %v1799, 2
    %v1801 = vadd.f32 %v1799, %v1800
    %v1802 = vrot.slane %v1801, 1
    %v1803 = vadd.f32 %v1801, %v1802
    %v1804 = vsel %vm62, %v1722, 0.0
    %v1805 = vrot.slane %v1804, 4
    %v1806 = vadd.f32 %v1804, %v1805
    %v1807 = vrot.slane %v1806, 2
    %v1808 = vadd.f32 %v1806, %v1807
    %v1809 = vrot.slane %v1808, 1
    %v1810 = vadd.f32 %v1808, %v1809
    %v1811 = vsel %vm62, %v1723, 0.0
    %v1812 = vrot.slane %v1811, 4
    %v1813 = vadd.f32 %v1811, %v1812
    %v1814 = vrot.slane %v1813, 2
    %v1815 = vadd.f32 %v1813, %v1814
    %v1816 = vrot.slane %v1815, 1
    %v1817 = vadd.f32 %v1815, %v1816
    %v1818 = vsel %vm62, %v1724, 0.0
    %v1819 = vrot.slane %v1818, 4
    %v1820 = vadd.f32 %v1818, %v1819
    %v1821 = vrot.slane %v1820, 2
    %v1822 = vadd.f32 %v1820, %v1821
    %v1823 = vrot.slane %v1822, 1
    %v1824 = vadd.f32 %v1822, %v1823
    %v1825 = vsel %vm62, %v1725, 0.0
    %v1826 = vrot.slane %v1825, 4
    %v1827 = vadd.f32 %v1825, %v1826
    %v1828 = vrot.slane %v1827, 2
    %v1829 = vadd.f32 %v1827, %v1828
    %v1830 = vrot.slane %v1829, 1
    %v1831 = vadd.f32 %v1829, %v1830
    %v1832 = vsel %vm62, %v1726, 0.0
    %v1833 = vrot.slane %v1832, 4
    %v1834 = vadd.f32 %v1832, %v1833
    %v1835 = vrot.slane %v1834, 2
    %v1836 = vadd.f32 %v1834, %v1835
    %v1837 = vrot.slane %v1836, 1
    %v1838 = vadd.f32 %v1836, %v1837
    %v1839 = vsel %vm1228, %v56, -inf
    %1840 = vmax.xlane.f32.xlu0 %v1839
    %v1841 = vpop.xlane.xlu0 %1840
    %v1842 = vsel %vm1228, %v57, -inf
    %1843 = vmax.xlane.f32.xlu0 %v1842
    %v1844 = vpop.xlane.xlu0 %1843
    %vm1845 = vcmp.eq.f32.partialorder %v56, %v1841
    %vm1846 = vcmp.eq.f32.partialorder %v57, %v1844
    %v1847 = vsel %vm1845, %v344, 8
    %v1848 = vsel %vm1846, %v344, 8
    %v1849 = vsel %vm1228, %v1847, 2147483647
    %v1850 = vand.u32 %v1849, 65535
    %v1851 = vshra.s32 %v1849, 16
    %v1852 = vcvt.s32.f32 %v1850
    %v1853 = vcvt.s32.f32 %v1851
    %1854 = vmin.xlane.f32.xlu0 %v1853
    %v1855 = vpop.xlane.xlu0 %1854
    %vm1856 = vcmp.eq.f32.partialorder %v1853, %v1855
    %v1857 = vsel %vm1856, %v1852, inf
    %1858 = vmin.xlane.f32.xlu0 %v1857
    %v1859 = vpop.xlane.xlu0 %1858
    %v1860 = vcvt.f32.s32 %v1859
    %v1861 = vcvt.f32.s32 %v1855
    %v1862 = vshll.u32 %v1861, 16
    %v1863 = vadd.s32 %v1862, %v1860
    %v1864 = vsel %vm1228, %v1848, 2147483647
    %v1865 = vand.u32 %v1864, 65535
    %v1866 = vshra.s32 %v1864, 16
    %v1867 = vcvt.s32.f32 %v1865
    %v1868 = vcvt.s32.f32 %v1866
    %1869 = vmin.xlane.f32.xlu0 %v1868
    %v1870 = vpop.xlane.xlu0 %1869
    %vm1871 = vcmp.eq.f32.partialorder %v1868, %v1870
    %v1872 = vsel %vm1871, %v1867, inf
    %1873 = vmin.xlane.f32.xlu0 %v1872
    %v1874 = vpop.xlane.xlu0 %1873
    %v1875 = vcvt.f32.s32 %v1874
    %v1876 = vcvt.f32.s32 %v1870
    %v1877 = vshll.u32 %v1876, 16
    %v1878 = vadd.s32 %v1877, %v1875
    %vm1879 = vcmp.eq.s32.totalorder %v344, %v1863
    %vm1880 = vcmp.eq.s32.totalorder %v344, %v1878
    %v1881 = vsel %vm1879, 1, 0
    %v1882 = vsel %vm1880, 1, 0
    %v1883 = vcvt.s32.f32 %v1881
    %v1884 = vcvt.s32.f32 %v1882
    %v1885 = vlaneseq
    %v1886 = vshrl.u32 %v1885, 7
    %v1887 = vsub.s32 0, %v1886
    %v1888 = vrot.slane %v1883, %v1887
    %1890 = vbcast.lane.b32.xlu0 %v1888, 256
    %v1891 = vpop.permute.xlu0 %1890
    %v1892 = vlaneseq
    %v1893 = vshrl.u32 %v1892, 7
    %v1894 = vsub.s32 1, %v1893
    %v1895 = vrot.slane %v1883, %v1894
    %1897 = vbcast.lane.b32.xlu0 %v1895, 256
    %v1898 = vpop.permute.xlu0 %1897
    %v1899 = vlaneseq
    %v1900 = vshrl.u32 %v1899, 7
    %v1901 = vsub.s32 2, %v1900
    %v1902 = vrot.slane %v1883, %v1901
    %1904 = vbcast.lane.b32.xlu0 %v1902, 256
    %v1905 = vpop.permute.xlu0 %1904
    %v1906 = vlaneseq
    %v1907 = vshrl.u32 %v1906, 7
    %v1908 = vsub.s32 3, %v1907
    %v1909 = vrot.slane %v1883, %v1908
    %1911 = vbcast.lane.b32.xlu0 %v1909, 256
    %v1912 = vpop.permute.xlu0 %1911
    %v1913 = vlaneseq
    %v1914 = vshrl.u32 %v1913, 7
    %v1915 = vsub.s32 4, %v1914
    %v1916 = vrot.slane %v1883, %v1915
    %1918 = vbcast.lane.b32.xlu0 %v1916, 256
    %v1919 = vpop.permute.xlu0 %1918
    %v1920 = vlaneseq
    %v1921 = vshrl.u32 %v1920, 7
    %v1922 = vsub.s32 5, %v1921
    %v1923 = vrot.slane %v1883, %v1922
    %1925 = vbcast.lane.b32.xlu0 %v1923, 256
    %v1926 = vpop.permute.xlu0 %1925
    %v1927 = vlaneseq
    %v1928 = vshrl.u32 %v1927, 7
    %v1929 = vsub.s32 6, %v1928
    %v1930 = vrot.slane %v1883, %v1929
    %1932 = vbcast.lane.b32.xlu0 %v1930, 256
    %v1933 = vpop.permute.xlu0 %1932
    %v1934 = vlaneseq
    %v1935 = vshrl.u32 %v1934, 7
    %v1936 = vsub.s32 7, %v1935
    %v1937 = vrot.slane %v1883, %v1936
    %1939 = vbcast.lane.b32.xlu0 %v1937, 256
    %v1940 = vpop.permute.xlu0 %1939
    %v1941 = vlaneseq
    %v1942 = vshrl.u32 %v1941, 7
    %v1943 = vsub.s32 0, %v1942
    %v1944 = vrot.slane %v1884, %v1943
    %1946 = vbcast.lane.b32.xlu0 %v1944, 256
    %v1947 = vpop.permute.xlu0 %1946
    %v1948 = vlaneseq
    %v1949 = vshrl.u32 %v1948, 7
    %v1950 = vsub.s32 1, %v1949
    %v1951 = vrot.slane %v1884, %v1950
    %1953 = vbcast.lane.b32.xlu0 %v1951, 256
    %v1954 = vpop.permute.xlu0 %1953
    %v1955 = vlaneseq
    %v1956 = vshrl.u32 %v1955, 7
    %v1957 = vsub.s32 2, %v1956
    %v1958 = vrot.slane %v1884, %v1957
    %1960 = vbcast.lane.b32.xlu0 %v1958, 256
    %v1961 = vpop.permute.xlu0 %1960
    %v1962 = vlaneseq
    %v1963 = vshrl.u32 %v1962, 7
    %v1964 = vsub.s32 3, %v1963
    %v1965 = vrot.slane %v1884, %v1964
    %1967 = vbcast.lane.b32.xlu0 %v1965, 256
    %v1968 = vpop.permute.xlu0 %1967
    %v1969 = vlaneseq
    %v1970 = vshrl.u32 %v1969, 7
    %v1971 = vsub.s32 4, %v1970
    %v1972 = vrot.slane %v1884, %v1971
    %1974 = vbcast.lane.b32.xlu0 %v1972, 256
    %v1975 = vpop.permute.xlu0 %1974
    %v1976 = vlaneseq
    %v1977 = vshrl.u32 %v1976, 7
    %v1978 = vsub.s32 5, %v1977
    %v1979 = vrot.slane %v1884, %v1978
    %1981 = vbcast.lane.b32.xlu0 %v1979, 256
    %v1982 = vpop.permute.xlu0 %1981
    %v1983 = vlaneseq
    %v1984 = vshrl.u32 %v1983, 7
    %v1985 = vsub.s32 6, %v1984
    %v1986 = vrot.slane %v1884, %v1985
    %1988 = vbcast.lane.b32.xlu0 %v1986, 256
    %v1989 = vpop.permute.xlu0 %1988
    %v1990 = vlaneseq
    %v1991 = vshrl.u32 %v1990, 7
    %v1992 = vsub.s32 7, %v1991
    %v1993 = vrot.slane %v1884, %v1992
    %1995 = vbcast.lane.b32.xlu0 %v1993, 256
    %v1996 = vpop.permute.xlu0 %1995
    %v1997 = vmul.f32 %v1891, %v178
    %v1998 = vmul.f32 %v1898, %v183
    %v1999 = vmul.f32 %v1905, %v188
    %v2000 = vmul.f32 %v1912, %v193
    %v2001 = vmul.f32 %v1919, %v198
    %v2002 = vmul.f32 %v1926, %v203
    %v2003 = vmul.f32 %v1933, %v208
    %v2004 = vmul.f32 %v1940, %v213
    %v2005 = vmul.f32 %v1947, %v218
    %v2006 = vmul.f32 %v1954, %v223
    %v2007 = vmul.f32 %v1961, %v228
    %v2008 = vmul.f32 %v1968, %v233
    %v2009 = vmul.f32 %v1975, %v238
    %v2010 = vmul.f32 %v1982, %v243
    %v2011 = vmul.f32 %v1989, %v248
    %v2012 = vmul.f32 %v1996, %v253
    %v2013 = vsel %vm62, %v1997, 0.0
    %v2014 = vrot.slane %v2013, 4
    %v2015 = vadd.f32 %v2013, %v2014
    %v2016 = vrot.slane %v2015, 2
    %v2017 = vadd.f32 %v2015, %v2016
    %v2018 = vrot.slane %v2017, 1
    %v2019 = vadd.f32 %v2017, %v2018
    %v2020 = vsel %vm62, %v1998, 0.0
    %v2021 = vrot.slane %v2020, 4
    %v2022 = vadd.f32 %v2020, %v2021
    %v2023 = vrot.slane %v2022, 2
    %v2024 = vadd.f32 %v2022, %v2023
    %v2025 = vrot.slane %v2024, 1
    %v2026 = vadd.f32 %v2024, %v2025
    %v2027 = vsel %vm62, %v1999, 0.0
    %v2028 = vrot.slane %v2027, 4
    %v2029 = vadd.f32 %v2027, %v2028
    %v2030 = vrot.slane %v2029, 2
    %v2031 = vadd.f32 %v2029, %v2030
    %v2032 = vrot.slane %v2031, 1
    %v2033 = vadd.f32 %v2031, %v2032
    %v2034 = vsel %vm62, %v2000, 0.0
    %v2035 = vrot.slane %v2034, 4
    %v2036 = vadd.f32 %v2034, %v2035
    %v2037 = vrot.slane %v2036, 2
    %v2038 = vadd.f32 %v2036, %v2037
    %v2039 = vrot.slane %v2038, 1
    %v2040 = vadd.f32 %v2038, %v2039
    %v2041 = vsel %vm62, %v2001, 0.0
    %v2042 = vrot.slane %v2041, 4
    %v2043 = vadd.f32 %v2041, %v2042
    %v2044 = vrot.slane %v2043, 2
    %v2045 = vadd.f32 %v2043, %v2044
    %v2046 = vrot.slane %v2045, 1
    %v2047 = vadd.f32 %v2045, %v2046
    %v2048 = vsel %vm62, %v2002, 0.0
    %v2049 = vrot.slane %v2048, 4
    %v2050 = vadd.f32 %v2048, %v2049
    %v2051 = vrot.slane %v2050, 2
    %v2052 = vadd.f32 %v2050, %v2051
    %v2053 = vrot.slane %v2052, 1
    %v2054 = vadd.f32 %v2052, %v2053
    %v2055 = vsel %vm62, %v2003, 0.0
    %v2056 = vrot.slane %v2055, 4
    %v2057 = vadd.f32 %v2055, %v2056
    %v2058 = vrot.slane %v2057, 2
    %v2059 = vadd.f32 %v2057, %v2058
    %v2060 = vrot.slane %v2059, 1
    %v2061 = vadd.f32 %v2059, %v2060
    %v2062 = vsel %vm62, %v2004, 0.0
    %v2063 = vrot.slane %v2062, 4
    %v2064 = vadd.f32 %v2062, %v2063
    %v2065 = vrot.slane %v2064, 2
    %v2066 = vadd.f32 %v2064, %v2065
    %v2067 = vrot.slane %v2066, 1
    %v2068 = vadd.f32 %v2066, %v2067
    %v2069 = vsel %vm62, %v2005, 0.0
    %v2070 = vrot.slane %v2069, 4
    %v2071 = vadd.f32 %v2069, %v2070
    %v2072 = vrot.slane %v2071, 2
    %v2073 = vadd.f32 %v2071, %v2072
    %v2074 = vrot.slane %v2073, 1
    %v2075 = vadd.f32 %v2073, %v2074
    %v2076 = vsel %vm62, %v2006, 0.0
    %v2077 = vrot.slane %v2076, 4
    %v2078 = vadd.f32 %v2076, %v2077
    %v2079 = vrot.slane %v2078, 2
    %v2080 = vadd.f32 %v2078, %v2079
    %v2081 = vrot.slane %v2080, 1
    %v2082 = vadd.f32 %v2080, %v2081
    %v2083 = vsel %vm62, %v2007, 0.0
    %v2084 = vrot.slane %v2083, 4
    %v2085 = vadd.f32 %v2083, %v2084
    %v2086 = vrot.slane %v2085, 2
    %v2087 = vadd.f32 %v2085, %v2086
    %v2088 = vrot.slane %v2087, 1
    %v2089 = vadd.f32 %v2087, %v2088
    %v2090 = vsel %vm62, %v2008, 0.0
    %v2091 = vrot.slane %v2090, 4
    %v2092 = vadd.f32 %v2090, %v2091
    %v2093 = vrot.slane %v2092, 2
    %v2094 = vadd.f32 %v2092, %v2093
    %v2095 = vrot.slane %v2094, 1
    %v2096 = vadd.f32 %v2094, %v2095
    %v2097 = vsel %vm62, %v2009, 0.0
    %v2098 = vrot.slane %v2097, 4
    %v2099 = vadd.f32 %v2097, %v2098
    %v2100 = vrot.slane %v2099, 2
    %v2101 = vadd.f32 %v2099, %v2100
    %v2102 = vrot.slane %v2101, 1
    %v2103 = vadd.f32 %v2101, %v2102
    %v2104 = vsel %vm62, %v2010, 0.0
    %v2105 = vrot.slane %v2104, 4
    %v2106 = vadd.f32 %v2104, %v2105
    %v2107 = vrot.slane %v2106, 2
    %v2108 = vadd.f32 %v2106, %v2107
    %v2109 = vrot.slane %v2108, 1
    %v2110 = vadd.f32 %v2108, %v2109
    %v2111 = vsel %vm62, %v2011, 0.0
    %v2112 = vrot.slane %v2111, 4
    %v2113 = vadd.f32 %v2111, %v2112
    %v2114 = vrot.slane %v2113, 2
    %v2115 = vadd.f32 %v2113, %v2114
    %v2116 = vrot.slane %v2115, 1
    %v2117 = vadd.f32 %v2115, %v2116
    %v2118 = vsel %vm62, %v2012, 0.0
    %v2119 = vrot.slane %v2118, 4
    %v2120 = vadd.f32 %v2118, %v2119
    %v2121 = vrot.slane %v2120, 2
    %v2122 = vadd.f32 %v2120, %v2121
    %v2123 = vrot.slane %v2122, 1
    %v2124 = vadd.f32 %v2122, %v2123
    %v2125 = vmul.f32 %v2019, 0.17677669
    %v2126 = vmul.f32 %v2026, 0.17677669
    %v2127 = vmul.f32 %v2033, 0.17677669
    %v2128 = vmul.f32 %v2040, 0.17677669
    %v2129 = vmul.f32 %v2047, 0.17677669
    %v2130 = vmul.f32 %v2054, 0.17677669
    %v2131 = vmul.f32 %v2061, 0.17677669
    %v2132 = vmul.f32 %v2068, 0.17677669
    %v2133 = vmul.f32 %v2075, 0.17677669
    %v2134 = vmul.f32 %v2082, 0.17677669
    %v2135 = vmul.f32 %v2089, 0.17677669
    %v2136 = vmul.f32 %v2096, 0.17677669
    %v2137 = vmul.f32 %v2103, 0.17677669
    %v2138 = vmul.f32 %v2110, 0.17677669
    %v2139 = vmul.f32 %v2117, 0.17677669
    %v2140 = vmul.f32 %v2124, 0.17677669
    %v2141 = vmul.f32 %v2125, %v178
    %v2142 = vmul.f32 %v2126, %v183
    %v2143 = vmul.f32 %v2127, %v188
    %v2144 = vmul.f32 %v2128, %v193
    %v2145 = vmul.f32 %v2129, %v198
    %v2146 = vmul.f32 %v2130, %v203
    %v2147 = vmul.f32 %v2131, %v208
    %v2148 = vmul.f32 %v2132, %v213
    %v2149 = vmul.f32 %v2133, %v218
    %v2150 = vmul.f32 %v2134, %v223
    %v2151 = vmul.f32 %v2135, %v228
    %v2152 = vmul.f32 %v2136, %v233
    %v2153 = vmul.f32 %v2137, %v238
    %v2154 = vmul.f32 %v2138, %v243
    %v2155 = vmul.f32 %v2139, %v248
    %v2156 = vmul.f32 %v2140, %v253
    %v2157 = vsel %vm62, %v2141, 0.0
    %2158 = vadd.xlane.f32.xlu0 %v2157
    %v2159 = vpop.xlane.xlu0 %2158
    %v2160 = vsel %vm62, %v2142, 0.0
    %2161 = vadd.xlane.f32.xlu0 %v2160
    %v2162 = vpop.xlane.xlu0 %2161
    %v2163 = vsel %vm62, %v2143, 0.0
    %2164 = vadd.xlane.f32.xlu0 %v2163
    %v2165 = vpop.xlane.xlu0 %2164
    %v2166 = vsel %vm62, %v2144, 0.0
    %2167 = vadd.xlane.f32.xlu0 %v2166
    %v2168 = vpop.xlane.xlu0 %2167
    %v2169 = vsel %vm62, %v2145, 0.0
    %2170 = vadd.xlane.f32.xlu0 %v2169
    %v2171 = vpop.xlane.xlu0 %2170
    %v2172 = vsel %vm62, %v2146, 0.0
    %2173 = vadd.xlane.f32.xlu0 %v2172
    %v2174 = vpop.xlane.xlu0 %2173
    %v2175 = vsel %vm62, %v2147, 0.0
    %2176 = vadd.xlane.f32.xlu0 %v2175
    %v2177 = vpop.xlane.xlu0 %2176
    %v2178 = vsel %vm62, %v2148, 0.0
    %2179 = vadd.xlane.f32.xlu0 %v2178
    %v2180 = vpop.xlane.xlu0 %2179
    %v2181 = vsel %vm62, %v2149, 0.0
    %2182 = vadd.xlane.f32.xlu0 %v2181
    %v2183 = vpop.xlane.xlu0 %2182
    %v2184 = vsel %vm62, %v2150, 0.0
    %2185 = vadd.xlane.f32.xlu0 %v2184
    %v2186 = vpop.xlane.xlu0 %2185
    %v2187 = vsel %vm62, %v2151, 0.0
    %2188 = vadd.xlane.f32.xlu0 %v2187
    %v2189 = vpop.xlane.xlu0 %2188
    %v2190 = vsel %vm62, %v2152, 0.0
    %2191 = vadd.xlane.f32.xlu0 %v2190
    %v2192 = vpop.xlane.xlu0 %2191
    %v2193 = vsel %vm62, %v2153, 0.0
    %2194 = vadd.xlane.f32.xlu0 %v2193
    %v2195 = vpop.xlane.xlu0 %2194
    %v2196 = vsel %vm62, %v2154, 0.0
    %2197 = vadd.xlane.f32.xlu0 %v2196
    %v2198 = vpop.xlane.xlu0 %2197
    %v2199 = vsel %vm62, %v2155, 0.0
    %2200 = vadd.xlane.f32.xlu0 %v2199
    %v2201 = vpop.xlane.xlu0 %2200
    %v2202 = vsel %vm62, %v2156, 0.0
    %2203 = vadd.xlane.f32.xlu0 %v2202
    %v2204 = vpop.xlane.xlu0 %2203
    %v2221 = vlaneseq
    %v2222 = vshrl.u32 %v2221, 7
    %v2223 = vsub.s32 %v344, %v2222
    %v2224 = vrot.slane %v2159, %v2223
    %v2225 = vlaneseq
    %v2226 = vshrl.u32 %v2225, 7
    %v2227 = vsub.s32 %v344, %v2226
    %v2228 = vrot.slane %v2162, %v2227
    %v2229 = vlaneseq
    %v2230 = vshrl.u32 %v2229, 7
    %v2231 = vsub.s32 %v344, %v2230
    %v2232 = vrot.slane %v2165, %v2231
    %v2233 = vlaneseq
    %v2234 = vshrl.u32 %v2233, 7
    %v2235 = vsub.s32 %v344, %v2234
    %v2236 = vrot.slane %v2168, %v2235
    %v2237 = vlaneseq
    %v2238 = vshrl.u32 %v2237, 7
    %v2239 = vsub.s32 %v344, %v2238
    %v2240 = vrot.slane %v2171, %v2239
    %v2241 = vlaneseq
    %v2242 = vshrl.u32 %v2241, 7
    %v2243 = vsub.s32 %v344, %v2242
    %v2244 = vrot.slane %v2174, %v2243
    %v2245 = vlaneseq
    %v2246 = vshrl.u32 %v2245, 7
    %v2247 = vsub.s32 %v344, %v2246
    %v2248 = vrot.slane %v2177, %v2247
    %v2249 = vlaneseq
    %v2250 = vshrl.u32 %v2249, 7
    %v2251 = vsub.s32 %v344, %v2250
    %v2252 = vrot.slane %v2180, %v2251
    %v2253 = vlaneseq
    %v2254 = vshrl.u32 %v2253, 7
    %v2255 = vsub.s32 %v344, %v2254
    %v2256 = vrot.slane %v2183, %v2255
    %v2257 = vlaneseq
    %v2258 = vshrl.u32 %v2257, 7
    %v2259 = vsub.s32 %v344, %v2258
    %v2260 = vrot.slane %v2186, %v2259
    %v2261 = vlaneseq
    %v2262 = vshrl.u32 %v2261, 7
    %v2263 = vsub.s32 %v344, %v2262
    %v2264 = vrot.slane %v2189, %v2263
    %v2265 = vlaneseq
    %v2266 = vshrl.u32 %v2265, 7
    %v2267 = vsub.s32 %v344, %v2266
    %v2268 = vrot.slane %v2192, %v2267
    %v2269 = vlaneseq
    %v2270 = vshrl.u32 %v2269, 7
    %v2271 = vsub.s32 %v344, %v2270
    %v2272 = vrot.slane %v2195, %v2271
    %v2273 = vlaneseq
    %v2274 = vshrl.u32 %v2273, 7
    %v2275 = vsub.s32 %v344, %v2274
    %v2276 = vrot.slane %v2198, %v2275
    %v2277 = vlaneseq
    %v2278 = vshrl.u32 %v2277, 7
    %v2279 = vsub.s32 %v344, %v2278
    %v2280 = vrot.slane %v2201, %v2279
    %v2281 = vlaneseq
    %v2282 = vshrl.u32 %v2281, 7
    %v2283 = vsub.s32 %v344, %v2282
    %v2284 = vrot.slane %v2204, %v2283
    %v2285 = vsel %vm1205, %v2228, %v2224
    %v2286 = vsel %vm1207, %v2232, %v2285
    %v2287 = vsel %vm1209, %v2236, %v2286
    %v2288 = vsel %vm1211, %v2240, %v2287
    %v2289 = vsel %vm1213, %v2244, %v2288
    %v2290 = vsel %vm1215, %v2248, %v2289
    %v2291 = vsel %vm1217, %v2252, %v2290
    %v2292 = vsel %vm1205, %v2260, %v2256
    %v2293 = vsel %vm1207, %v2264, %v2292
    %v2294 = vsel %vm1209, %v2268, %v2293
    %v2295 = vsel %vm1211, %v2272, %v2294
    %v2296 = vsel %vm1213, %v2276, %v2295
    %v2297 = vsel %vm1215, %v2280, %v2296
    %v2298 = vsel %vm1217, %v2284, %v2297
    %v2301 = vsel %vm1228, %v2291, -inf
    %2302 = vmax.xlane.f32.xlu0 %v2301
    %v2303 = vpop.xlane.xlu0 %2302
    %v2304 = vsel %vm1228, %v2298, -inf
    %2305 = vmax.xlane.f32.xlu0 %v2304
    %v2306 = vpop.xlane.xlu0 %2305
    %v2309 = vlaneseq
    %v2310 = vshrl.u32 %v2309, 7
    %v2311 = vsub.s32 0, %v2310
    %v2312 = vrot.slane %v2303, %v2311
    %v2313 = vlaneseq
    %v2314 = vshrl.u32 %v2313, 7
    %v2315 = vsub.s32 1, %v2314
    %v2316 = vrot.slane %v2303, %v2315
    %v2317 = vlaneseq
    %v2318 = vshrl.u32 %v2317, 7
    %v2319 = vsub.s32 2, %v2318
    %v2320 = vrot.slane %v2303, %v2319
    %v2321 = vlaneseq
    %v2322 = vshrl.u32 %v2321, 7
    %v2323 = vsub.s32 3, %v2322
    %v2324 = vrot.slane %v2303, %v2323
    %v2325 = vlaneseq
    %v2326 = vshrl.u32 %v2325, 7
    %v2327 = vsub.s32 4, %v2326
    %v2328 = vrot.slane %v2303, %v2327
    %v2329 = vlaneseq
    %v2330 = vshrl.u32 %v2329, 7
    %v2331 = vsub.s32 5, %v2330
    %v2332 = vrot.slane %v2303, %v2331
    %v2333 = vlaneseq
    %v2334 = vshrl.u32 %v2333, 7
    %v2335 = vsub.s32 6, %v2334
    %v2336 = vrot.slane %v2303, %v2335
    %v2337 = vlaneseq
    %v2338 = vshrl.u32 %v2337, 7
    %v2339 = vsub.s32 7, %v2338
    %v2340 = vrot.slane %v2303, %v2339
    %v2341 = vlaneseq
    %v2342 = vshrl.u32 %v2341, 7
    %v2343 = vsub.s32 0, %v2342
    %v2344 = vrot.slane %v2306, %v2343
    %v2345 = vlaneseq
    %v2346 = vshrl.u32 %v2345, 7
    %v2347 = vsub.s32 1, %v2346
    %v2348 = vrot.slane %v2306, %v2347
    %v2349 = vlaneseq
    %v2350 = vshrl.u32 %v2349, 7
    %v2351 = vsub.s32 2, %v2350
    %v2352 = vrot.slane %v2306, %v2351
    %v2353 = vlaneseq
    %v2354 = vshrl.u32 %v2353, 7
    %v2355 = vsub.s32 3, %v2354
    %v2356 = vrot.slane %v2306, %v2355
    %v2357 = vlaneseq
    %v2358 = vshrl.u32 %v2357, 7
    %v2359 = vsub.s32 4, %v2358
    %v2360 = vrot.slane %v2306, %v2359
    %v2361 = vlaneseq
    %v2362 = vshrl.u32 %v2361, 7
    %v2363 = vsub.s32 5, %v2362
    %v2364 = vrot.slane %v2306, %v2363
    %v2365 = vlaneseq
    %v2366 = vshrl.u32 %v2365, 7
    %v2367 = vsub.s32 6, %v2366
    %v2368 = vrot.slane %v2306, %v2367
    %v2369 = vlaneseq
    %v2370 = vshrl.u32 %v2369, 7
    %v2371 = vsub.s32 7, %v2370
    %v2372 = vrot.slane %v2306, %v2371
    %v2389 = vsub.f32 %v2159, %v2312
    %v2390 = vsub.f32 %v2162, %v2316
    %v2391 = vsub.f32 %v2165, %v2320
    %v2392 = vsub.f32 %v2168, %v2324
    %v2393 = vsub.f32 %v2171, %v2328
    %v2394 = vsub.f32 %v2174, %v2332
    %v2395 = vsub.f32 %v2177, %v2336
    %v2396 = vsub.f32 %v2180, %v2340
    %v2397 = vsub.f32 %v2183, %v2344
    %v2398 = vsub.f32 %v2186, %v2348
    %v2399 = vsub.f32 %v2189, %v2352
    %v2400 = vsub.f32 %v2192, %v2356
    %v2401 = vsub.f32 %v2195, %v2360
    %v2402 = vsub.f32 %v2198, %v2364
    %v2403 = vsub.f32 %v2201, %v2368
    %v2404 = vsub.f32 %v2204, %v2372
    %v2405 = vmul.f32 %v2389, 1.442695
    %v2406 = vpow.pop %v2405
    %v2407 = vmul.f32 %v2390, 1.442695
    %v2408 = vpow.pop %v2407
    %v2409 = vmul.f32 %v2391, 1.442695
    %v2410 = vpow.pop %v2409
    %v2411 = vmul.f32 %v2392, 1.442695
    %v2412 = vpow.pop %v2411
    %v2413 = vmul.f32 %v2393, 1.442695
    %v2414 = vpow.pop %v2413
    %v2415 = vmul.f32 %v2394, 1.442695
    %v2416 = vpow.pop %v2415
    %v2417 = vmul.f32 %v2395, 1.442695
    %v2418 = vpow.pop %v2417
    %v2419 = vmul.f32 %v2396, 1.442695
    %v2420 = vpow.pop %v2419
    %v2421 = vmul.f32 %v2397, 1.442695
    %v2422 = vpow.pop %v2421
    %v2423 = vmul.f32 %v2398, 1.442695
    %v2424 = vpow.pop %v2423
    %v2425 = vmul.f32 %v2399, 1.442695
    %v2426 = vpow.pop %v2425
    %v2427 = vmul.f32 %v2400, 1.442695
    %v2428 = vpow.pop %v2427
    %v2429 = vmul.f32 %v2401, 1.442695
    %v2430 = vpow.pop %v2429
    %v2431 = vmul.f32 %v2402, 1.442695
    %v2432 = vpow.pop %v2431
    %v2433 = vmul.f32 %v2403, 1.442695
    %v2434 = vpow.pop %v2433
    %v2435 = vmul.f32 %v2404, 1.442695
    %v2436 = vpow.pop %v2435
    %2453 = vset.pattern.permute.xlu0 0
    %2454 = vperm.xlu0 %2453, %v2406
    %v2455 = vpop.permute.xlu0 %2454
    %2456 = vset.pattern.permute.xlu0 0
    %2457 = vperm.xlu0 %2456, %v2408
    %v2458 = vpop.permute.xlu0 %2457
    %2459 = vset.pattern.permute.xlu0 0
    %2460 = vperm.xlu0 %2459, %v2410
    %v2461 = vpop.permute.xlu0 %2460
    %2462 = vset.pattern.permute.xlu0 0
    %2463 = vperm.xlu0 %2462, %v2412
    %v2464 = vpop.permute.xlu0 %2463
    %2465 = vset.pattern.permute.xlu0 0
    %2466 = vperm.xlu0 %2465, %v2414
    %v2467 = vpop.permute.xlu0 %2466
    %2468 = vset.pattern.permute.xlu0 0
    %2469 = vperm.xlu0 %2468, %v2416
    %v2470 = vpop.permute.xlu0 %2469
    %2471 = vset.pattern.permute.xlu0 0
    %2472 = vperm.xlu0 %2471, %v2418
    %v2473 = vpop.permute.xlu0 %2472
    %2474 = vset.pattern.permute.xlu0 0
    %2475 = vperm.xlu0 %2474, %v2420
    %v2476 = vpop.permute.xlu0 %2475
    %2477 = vset.pattern.permute.xlu0 0
    %2478 = vperm.xlu0 %2477, %v2422
    %v2479 = vpop.permute.xlu0 %2478
    %2480 = vset.pattern.permute.xlu0 0
    %2481 = vperm.xlu0 %2480, %v2424
    %v2482 = vpop.permute.xlu0 %2481
    %2483 = vset.pattern.permute.xlu0 0
    %2484 = vperm.xlu0 %2483, %v2426
    %v2485 = vpop.permute.xlu0 %2484
    %2486 = vset.pattern.permute.xlu0 0
    %2487 = vperm.xlu0 %2486, %v2428
    %v2488 = vpop.permute.xlu0 %2487
    %2489 = vset.pattern.permute.xlu0 0
    %2490 = vperm.xlu0 %2489, %v2430
    %v2491 = vpop.permute.xlu0 %2490
    %2492 = vset.pattern.permute.xlu0 0
    %2493 = vperm.xlu0 %2492, %v2432
    %v2494 = vpop.permute.xlu0 %2493
    %2495 = vset.pattern.permute.xlu0 0
    %2496 = vperm.xlu0 %2495, %v2434
    %v2497 = vpop.permute.xlu0 %2496
    %2498 = vset.pattern.permute.xlu0 0
    %2499 = vperm.xlu0 %2498, %v2436
    %v2500 = vpop.permute.xlu0 %2499
    %v2501 = vlaneseq
    %v2502 = vshrl.u32 %v2501, 7
    %v2503 = vsub.s32 %v344, %v2502
    %v2504 = vrot.slane %v2455, %v2503
    %v2505 = vlaneseq
    %v2506 = vshrl.u32 %v2505, 7
    %v2507 = vsub.s32 %v344, %v2506
    %v2508 = vrot.slane %v2458, %v2507
    %v2509 = vlaneseq
    %v2510 = vshrl.u32 %v2509, 7
    %v2511 = vsub.s32 %v344, %v2510
    %v2512 = vrot.slane %v2461, %v2511
    %v2513 = vlaneseq
    %v2514 = vshrl.u32 %v2513, 7
    %v2515 = vsub.s32 %v344, %v2514
    %v2516 = vrot.slane %v2464, %v2515
    %v2517 = vlaneseq
    %v2518 = vshrl.u32 %v2517, 7
    %v2519 = vsub.s32 %v344, %v2518
    %v2520 = vrot.slane %v2467, %v2519
    %v2521 = vlaneseq
    %v2522 = vshrl.u32 %v2521, 7
    %v2523 = vsub.s32 %v344, %v2522
    %v2524 = vrot.slane %v2470, %v2523
    %v2525 = vlaneseq
    %v2526 = vshrl.u32 %v2525, 7
    %v2527 = vsub.s32 %v344, %v2526
    %v2528 = vrot.slane %v2473, %v2527
    %v2529 = vlaneseq
    %v2530 = vshrl.u32 %v2529, 7
    %v2531 = vsub.s32 %v344, %v2530
    %v2532 = vrot.slane %v2476, %v2531
    %v2533 = vlaneseq
    %v2534 = vshrl.u32 %v2533, 7
    %v2535 = vsub.s32 %v344, %v2534
    %v2536 = vrot.slane %v2479, %v2535
    %v2537 = vlaneseq
    %v2538 = vshrl.u32 %v2537, 7
    %v2539 = vsub.s32 %v344, %v2538
    %v2540 = vrot.slane %v2482, %v2539
    %v2541 = vlaneseq
    %v2542 = vshrl.u32 %v2541, 7
    %v2543 = vsub.s32 %v344, %v2542
    %v2544 = vrot.slane %v2485, %v2543
    %v2545 = vlaneseq
    %v2546 = vshrl.u32 %v2545, 7
    %v2547 = vsub.s32 %v344, %v2546
    %v2548 = vrot.slane %v2488, %v2547
    %v2549 = vlaneseq
    %v2550 = vshrl.u32 %v2549, 7
    %v2551 = vsub.s32 %v344, %v2550
    %v2552 = vrot.slane %v2491, %v2551
    %v2553 = vlaneseq
    %v2554 = vshrl.u32 %v2553, 7
    %v2555 = vsub.s32 %v344, %v2554
    %v2556 = vrot.slane %v2494, %v2555
    %v2557 = vlaneseq
    %v2558 = vshrl.u32 %v2557, 7
    %v2559 = vsub.s32 %v344, %v2558
    %v2560 = vrot.slane %v2497, %v2559
    %v2561 = vlaneseq
    %v2562 = vshrl.u32 %v2561, 7
    %v2563 = vsub.s32 %v344, %v2562
    %v2564 = vrot.slane %v2500, %v2563
    %v2565 = vsel %vm1205, %v2508, %v2504
    %v2566 = vsel %vm1207, %v2512, %v2565
    %v2567 = vsel %vm1209, %v2516, %v2566
    %v2568 = vsel %vm1211, %v2520, %v2567
    %v2569 = vsel %vm1213, %v2524, %v2568
    %v2570 = vsel %vm1215, %v2528, %v2569
    %v2571 = vsel %vm1217, %v2532, %v2570
    %v2572 = vsel %vm1205, %v2540, %v2536
    %v2573 = vsel %vm1207, %v2544, %v2572
    %v2574 = vsel %vm1209, %v2548, %v2573
    %v2575 = vsel %vm1211, %v2552, %v2574
    %v2576 = vsel %vm1213, %v2556, %v2575
    %v2577 = vsel %vm1215, %v2560, %v2576
    %v2578 = vsel %vm1217, %v2564, %v2577
    %v2581 = vsel %vm1228, %v2571, 0.0
    %2582 = vadd.xlane.f32.xlu0 %v2581
    %v2583 = vpop.xlane.xlu0 %2582
    %v2584 = vsel %vm1228, %v2578, 0.0
    %2585 = vadd.xlane.f32.xlu0 %v2584
    %v2586 = vpop.xlane.xlu0 %2585
    %v2587 = vrcp.pop %v2583
    %v2588 = vrcp.pop %v2586
    %v2591 = vlaneseq
    %v2592 = vshrl.u32 %v2591, 7
    %v2593 = vsub.s32 0, %v2592
    %v2594 = vrot.slane %v2587, %v2593
    %v2595 = vlaneseq
    %v2596 = vshrl.u32 %v2595, 7
    %v2597 = vsub.s32 1, %v2596
    %v2598 = vrot.slane %v2587, %v2597
    %v2599 = vlaneseq
    %v2600 = vshrl.u32 %v2599, 7
    %v2601 = vsub.s32 2, %v2600
    %v2602 = vrot.slane %v2587, %v2601
    %v2603 = vlaneseq
    %v2604 = vshrl.u32 %v2603, 7
    %v2605 = vsub.s32 3, %v2604
    %v2606 = vrot.slane %v2587, %v2605
    %v2607 = vlaneseq
    %v2608 = vshrl.u32 %v2607, 7
    %v2609 = vsub.s32 4, %v2608
    %v2610 = vrot.slane %v2587, %v2609
    %v2611 = vlaneseq
    %v2612 = vshrl.u32 %v2611, 7
    %v2613 = vsub.s32 5, %v2612
    %v2614 = vrot.slane %v2587, %v2613
    %v2615 = vlaneseq
    %v2616 = vshrl.u32 %v2615, 7
    %v2617 = vsub.s32 6, %v2616
    %v2618 = vrot.slane %v2587, %v2617
    %v2619 = vlaneseq
    %v2620 = vshrl.u32 %v2619, 7
    %v2621 = vsub.s32 7, %v2620
    %v2622 = vrot.slane %v2587, %v2621
    %v2623 = vlaneseq
    %v2624 = vshrl.u32 %v2623, 7
    %v2625 = vsub.s32 0, %v2624
    %v2626 = vrot.slane %v2588, %v2625
    %v2627 = vlaneseq
    %v2628 = vshrl.u32 %v2627, 7
    %v2629 = vsub.s32 1, %v2628
    %v2630 = vrot.slane %v2588, %v2629
    %v2631 = vlaneseq
    %v2632 = vshrl.u32 %v2631, 7
    %v2633 = vsub.s32 2, %v2632
    %v2634 = vrot.slane %v2588, %v2633
    %v2635 = vlaneseq
    %v2636 = vshrl.u32 %v2635, 7
    %v2637 = vsub.s32 3, %v2636
    %v2638 = vrot.slane %v2588, %v2637
    %v2639 = vlaneseq
    %v2640 = vshrl.u32 %v2639, 7
    %v2641 = vsub.s32 4, %v2640
    %v2642 = vrot.slane %v2588, %v2641
    %v2643 = vlaneseq
    %v2644 = vshrl.u32 %v2643, 7
    %v2645 = vsub.s32 5, %v2644
    %v2646 = vrot.slane %v2588, %v2645
    %v2647 = vlaneseq
    %v2648 = vshrl.u32 %v2647, 7
    %v2649 = vsub.s32 6, %v2648
    %v2650 = vrot.slane %v2588, %v2649
    %v2651 = vlaneseq
    %v2652 = vshrl.u32 %v2651, 7
    %v2653 = vsub.s32 7, %v2652
    %v2654 = vrot.slane %v2588, %v2653
    %v2671 = vmul.f32 %v2406, %v2594
    %v2672 = vmul.f32 %v2408, %v2598
    %v2673 = vmul.f32 %v2410, %v2602
    %v2674 = vmul.f32 %v2412, %v2606
    %v2675 = vmul.f32 %v2414, %v2610
    %v2676 = vmul.f32 %v2416, %v2614
    %v2677 = vmul.f32 %v2418, %v2618
    %v2678 = vmul.f32 %v2420, %v2622
    %v2679 = vmul.f32 %v2422, %v2626
    %v2680 = vmul.f32 %v2424, %v2630
    %v2681 = vmul.f32 %v2426, %v2634
    %v2682 = vmul.f32 %v2428, %v2638
    %v2683 = vmul.f32 %v2430, %v2642
    %v2684 = vmul.f32 %v2432, %v2646
    %v2685 = vmul.f32 %v2434, %v2650
    %v2686 = vmul.f32 %v2436, %v2654
    %2688 = vset.pattern.permute.xlu0 0
    %2689 = vperm.xlu0 %2688, %v2671
    %v2690 = vpop.permute.xlu0 %2689
    %2693 = vset.pattern.permute.xlu0 0
    %2694 = vperm.xlu0 %2693, %v2672
    %v2695 = vpop.permute.xlu0 %2694
    %2698 = vset.pattern.permute.xlu0 0
    %2699 = vperm.xlu0 %2698, %v2673
    %v2700 = vpop.permute.xlu0 %2699
    %2703 = vset.pattern.permute.xlu0 0
    %2704 = vperm.xlu0 %2703, %v2674
    %v2705 = vpop.permute.xlu0 %2704
    %2708 = vset.pattern.permute.xlu0 0
    %2709 = vperm.xlu0 %2708, %v2675
    %v2710 = vpop.permute.xlu0 %2709
    %2713 = vset.pattern.permute.xlu0 0
    %2714 = vperm.xlu0 %2713, %v2676
    %v2715 = vpop.permute.xlu0 %2714
    %2718 = vset.pattern.permute.xlu0 0
    %2719 = vperm.xlu0 %2718, %v2677
    %v2720 = vpop.permute.xlu0 %2719
    %2723 = vset.pattern.permute.xlu0 0
    %2724 = vperm.xlu0 %2723, %v2678
    %v2725 = vpop.permute.xlu0 %2724
    %2728 = vset.pattern.permute.xlu0 0
    %2729 = vperm.xlu0 %2728, %v2679
    %v2730 = vpop.permute.xlu0 %2729
    %2733 = vset.pattern.permute.xlu0 0
    %2734 = vperm.xlu0 %2733, %v2680
    %v2735 = vpop.permute.xlu0 %2734
    %2738 = vset.pattern.permute.xlu0 0
    %2739 = vperm.xlu0 %2738, %v2681
    %v2740 = vpop.permute.xlu0 %2739
    %2743 = vset.pattern.permute.xlu0 0
    %2744 = vperm.xlu0 %2743, %v2682
    %v2745 = vpop.permute.xlu0 %2744
    %2748 = vset.pattern.permute.xlu0 0
    %2749 = vperm.xlu0 %2748, %v2683
    %v2750 = vpop.permute.xlu0 %2749
    %2753 = vset.pattern.permute.xlu0 0
    %2754 = vperm.xlu0 %2753, %v2684
    %v2755 = vpop.permute.xlu0 %2754
    %2758 = vset.pattern.permute.xlu0 0
    %2759 = vperm.xlu0 %2758, %v2685
    %v2760 = vpop.permute.xlu0 %2759
    %2763 = vset.pattern.permute.xlu0 0
    %2764 = vperm.xlu0 %2763, %v2686
    %v2765 = vpop.permute.xlu0 %2764
    %v2767 = vmul.f32 %v2690, %v178
    %v2768 = vmul.f32 %v2695, %v183
    %v2769 = vmul.f32 %v2700, %v188
    %v2770 = vmul.f32 %v2705, %v193
    %v2771 = vmul.f32 %v2710, %v198
    %v2772 = vmul.f32 %v2715, %v203
    %v2773 = vmul.f32 %v2720, %v208
    %v2774 = vmul.f32 %v2725, %v213
    %v2775 = vmul.f32 %v2730, %v218
    %v2776 = vmul.f32 %v2735, %v223
    %v2777 = vmul.f32 %v2740, %v228
    %v2778 = vmul.f32 %v2745, %v233
    %v2779 = vmul.f32 %v2750, %v238
    %v2780 = vmul.f32 %v2755, %v243
    %v2781 = vmul.f32 %v2760, %v248
    %v2782 = vmul.f32 %v2765, %v253
    %v2783 = vsel %vm62, %v2767, 0.0
    %v2784 = vrot.slane %v2783, 4
    %v2785 = vadd.f32 %v2783, %v2784
    %v2786 = vrot.slane %v2785, 2
    %v2787 = vadd.f32 %v2785, %v2786
    %v2788 = vrot.slane %v2787, 1
    %v2789 = vadd.f32 %v2787, %v2788
    %v2790 = vsel %vm62, %v2768, 0.0
    %v2791 = vrot.slane %v2790, 4
    %v2792 = vadd.f32 %v2790, %v2791
    %v2793 = vrot.slane %v2792, 2
    %v2794 = vadd.f32 %v2792, %v2793
    %v2795 = vrot.slane %v2794, 1
    %v2796 = vadd.f32 %v2794, %v2795
    %v2797 = vsel %vm62, %v2769, 0.0
    %v2798 = vrot.slane %v2797, 4
    %v2799 = vadd.f32 %v2797, %v2798
    %v2800 = vrot.slane %v2799, 2
    %v2801 = vadd.f32 %v2799, %v2800
    %v2802 = vrot.slane %v2801, 1
    %v2803 = vadd.f32 %v2801, %v2802
    %v2804 = vsel %vm62, %v2770, 0.0
    %v2805 = vrot.slane %v2804, 4
    %v2806 = vadd.f32 %v2804, %v2805
    %v2807 = vrot.slane %v2806, 2
    %v2808 = vadd.f32 %v2806, %v2807
    %v2809 = vrot.slane %v2808, 1
    %v2810 = vadd.f32 %v2808, %v2809
    %v2811 = vsel %vm62, %v2771, 0.0
    %v2812 = vrot.slane %v2811, 4
    %v2813 = vadd.f32 %v2811, %v2812
    %v2814 = vrot.slane %v2813, 2
    %v2815 = vadd.f32 %v2813, %v2814
    %v2816 = vrot.slane %v2815, 1
    %v2817 = vadd.f32 %v2815, %v2816
    %v2818 = vsel %vm62, %v2772, 0.0
    %v2819 = vrot.slane %v2818, 4
    %v2820 = vadd.f32 %v2818, %v2819
    %v2821 = vrot.slane %v2820, 2
    %v2822 = vadd.f32 %v2820, %v2821
    %v2823 = vrot.slane %v2822, 1
    %v2824 = vadd.f32 %v2822, %v2823
    %v2825 = vsel %vm62, %v2773, 0.0
    %v2826 = vrot.slane %v2825, 4
    %v2827 = vadd.f32 %v2825, %v2826
    %v2828 = vrot.slane %v2827, 2
    %v2829 = vadd.f32 %v2827, %v2828
    %v2830 = vrot.slane %v2829, 1
    %v2831 = vadd.f32 %v2829, %v2830
    %v2832 = vsel %vm62, %v2774, 0.0
    %v2833 = vrot.slane %v2832, 4
    %v2834 = vadd.f32 %v2832, %v2833
    %v2835 = vrot.slane %v2834, 2
    %v2836 = vadd.f32 %v2834, %v2835
    %v2837 = vrot.slane %v2836, 1
    %v2838 = vadd.f32 %v2836, %v2837
    %v2839 = vsel %vm62, %v2775, 0.0
    %v2840 = vrot.slane %v2839, 4
    %v2841 = vadd.f32 %v2839, %v2840
    %v2842 = vrot.slane %v2841, 2
    %v2843 = vadd.f32 %v2841, %v2842
    %v2844 = vrot.slane %v2843, 1
    %v2845 = vadd.f32 %v2843, %v2844
    %v2846 = vsel %vm62, %v2776, 0.0
    %v2847 = vrot.slane %v2846, 4
    %v2848 = vadd.f32 %v2846, %v2847
    %v2849 = vrot.slane %v2848, 2
    %v2850 = vadd.f32 %v2848, %v2849
    %v2851 = vrot.slane %v2850, 1
    %v2852 = vadd.f32 %v2850, %v2851
    %v2853 = vsel %vm62, %v2777, 0.0
    %v2854 = vrot.slane %v2853, 4
    %v2855 = vadd.f32 %v2853, %v2854
    %v2856 = vrot.slane %v2855, 2
    %v2857 = vadd.f32 %v2855, %v2856
    %v2858 = vrot.slane %v2857, 1
    %v2859 = vadd.f32 %v2857, %v2858
    %v2860 = vsel %vm62, %v2778, 0.0
    %v2861 = vrot.slane %v2860, 4
    %v2862 = vadd.f32 %v2860, %v2861
    %v2863 = vrot.slane %v2862, 2
    %v2864 = vadd.f32 %v2862, %v2863
    %v2865 = vrot.slane %v2864, 1
    %v2866 = vadd.f32 %v2864, %v2865
    %v2867 = vsel %vm62, %v2779, 0.0
    %v2868 = vrot.slane %v2867, 4
    %v2869 = vadd.f32 %v2867, %v2868
    %v2870 = vrot.slane %v2869, 2
    %v2871 = vadd.f32 %v2869, %v2870
    %v2872 = vrot.slane %v2871, 1
    %v2873 = vadd.f32 %v2871, %v2872
    %v2874 = vsel %vm62, %v2780, 0.0
    %v2875 = vrot.slane %v2874, 4
    %v2876 = vadd.f32 %v2874, %v2875
    %v2877 = vrot.slane %v2876, 2
    %v2878 = vadd.f32 %v2876, %v2877
    %v2879 = vrot.slane %v2878, 1
    %v2880 = vadd.f32 %v2878, %v2879
    %v2881 = vsel %vm62, %v2781, 0.0
    %v2882 = vrot.slane %v2881, 4
    %v2883 = vadd.f32 %v2881, %v2882
    %v2884 = vrot.slane %v2883, 2
    %v2885 = vadd.f32 %v2883, %v2884
    %v2886 = vrot.slane %v2885, 1
    %v2887 = vadd.f32 %v2885, %v2886
    %v2888 = vsel %vm62, %v2782, 0.0
    %v2889 = vrot.slane %v2888, 4
    %v2890 = vadd.f32 %v2888, %v2889
    %v2891 = vrot.slane %v2890, 2
    %v2892 = vadd.f32 %v2890, %v2891
    %v2893 = vrot.slane %v2892, 1
    %v2894 = vadd.f32 %v2892, %v2893
    %v2895 = vld [vmem:[%s8] sm:$0xff]
    %v2896 = vld [vmem:[%s8 + $0x8] sm:$0xff]
    %v2897 = vld [vmem:[%s8 + $0x10] sm:$0xff]
    %v2898 = vld [vmem:[%s8 + $0x18] sm:$0xff]
    %v2899 = vld [vmem:[%s8 + $0x20] sm:$0xff]
    %v2900 = vld [vmem:[%s8 + $0x28] sm:$0xff]
    %v2901 = vld [vmem:[%s8 + $0x30] sm:$0xff]
    %v2902 = vld [vmem:[%s8 + $0x38] sm:$0xff]
    %v2919 = vsel %vm1205, %v2796, %v2789
    %v2920 = vsel %vm1207, %v2803, %v2919
    %v2921 = vsel %vm1209, %v2810, %v2920
    %v2922 = vsel %vm1211, %v2817, %v2921
    %v2923 = vsel %vm1213, %v2824, %v2922
    %v2924 = vsel %vm1215, %v2831, %v2923
    %v2925 = vsel %vm1217, %v2838, %v2924
    %v2926 = vsel %vm1205, %v2852, %v2845
    %v2927 = vsel %vm1207, %v2859, %v2926
    %v2928 = vsel %vm1209, %v2866, %v2927
    %v2929 = vsel %vm1211, %v2873, %v2928
    %v2930 = vsel %vm1213, %v2880, %v2929
    %v2931 = vsel %vm1215, %v2887, %v2930
    %v2932 = vsel %vm1217, %v2894, %v2931
    %v2933 = vsel %vm62, %v2925, 0
    %v2935 = vsel %vm62, %v2932, 0
    %2937 = vmatprep.subr.mxu0 0.0
    %2938 = vmatpush1.msra.mxu0 %v2899
    %2939 = vmatprep.subr.mxu0 0.0
    %2940 = vmatpush1.msra.mxu0 %v2900
    %2941 = vmatprep.subr.mxu0 0.0
    %2942 = vmatpush1.msra.mxu0 %v2901
    %2943 = vmatprep.subr.mxu0 0.0
    %2944 = vmatpush1.msra.mxu0 %v2902
    %2945 = vmatprep.subr.mxu0 0.0
    %2946 = vmatpush1.msra.mxu0 0.0
    %2947 = vmatprep.subr.mxu0 0.0
    %2948 = vmatpush1.msra.mxu0 0.0
    %2949 = vmatprep.subr.mxu0 0.0
    %2950 = vmatpush1.msra.mxu0 0.0
    %2951 = vmatprep.subr.mxu0 0.0
    %2952 = vmatpush1.msra.mxu0 0.0
    %2953 = vmatprep.subr.mxu0 0.0
    %2954 = vmatpush1.msra.mxu0 0.0
    %2955 = vmatprep.subr.mxu0 0.0
    %2956 = vmatpush1.msra.mxu0 0.0
    %2957 = vmatprep.subr.mxu0 0.0
    %2958 = vmatpush1.msra.mxu0 0.0
    %2959 = vmatprep.subr.mxu0 0.0
    %2960 = vmatpush1.msra.mxu0 0.0
    %2961 = vmatprep.subr.mxu0 0.0
    %2962 = vmatpush1.msra.mxu0 0.0
    %2963 = vmatprep.subr.mxu0 0.0
    %2964 = vmatpush1.msra.mxu0 0.0
    %2965 = vmatprep.subr.mxu0 0.0
    %2966 = vmatpush1.msra.mxu0 0.0
    %2967 = vmatprep.subr.mxu0 0.0
    %2968 = vmatpush1.msra.mxu0 0.0
    %2969 = vmatprep.subr.mxu0 0.0
    %2970 = vmatpush1.msra.mxu0 0.0
    %2971 = vmatprep.subr.mxu0 0.0
    %2972 = vmatpush1.msra.mxu0 0.0
    %2973 = vmatprep.subr.mxu0 0.0
    %2974 = vmatpush1.msra.mxu0 0.0
    %2975 = vmatprep.subr.mxu0 0.0
    %2976 = vmatpush1.msra.mxu0 0.0
    %2977 = vmatprep.subr.mxu0 0.0
    %2978 = vmatpush1.msra.mxu0 0.0
    %2979 = vmatprep.subr.mxu0 0.0
    %2980 = vmatpush1.msra.mxu0 0.0
    %2981 = vmatprep.subr.mxu0 0.0
    %2982 = vmatpush1.msra.mxu0 0.0
    %2983 = vmatprep.subr.mxu0 0.0
    %2984 = vmatpush1.msra.mxu0 0.0
    %2985 = vmatprep.subr.mxu0 0.0
    %2986 = vmatpush1.msra.mxu0 0.0
    %2987 = vmatprep.subr.mxu0 0.0
    %2988 = vmatpush1.msra.mxu0 0.0
    %2989 = vmatprep.subr.mxu0 0.0
    %2990 = vmatpush1.msra.mxu0 0.0
    %2991 = vmatprep.subr.mxu0 0.0
    %2992 = vmatpush1.msra.mxu0 0.0
    %2993 = vmatprep.subr.mxu0 0.0
    %2994 = vmatpush1.msra.mxu0 0.0
    %2995 = vmatprep.subr.mxu0 0.0
    %2996 = vmatpush1.msra.mxu0 0.0
    %2997 = vmatprep.subr.mxu0 0.0
    %2998 = vmatpush1.msra.mxu0 0.0
    %2999 = vmatprep.subr.mxu0 0.0
    %3000 = vmatpush1.msra.mxu0 0.0
    %3001 = vmatprep.mubr.f32.mxu0 0.0
    %3002 = vmatmul.mubr.f32.gmra.mrb[0].mxu0 %v2933
    %v3003 = vpop.f32.mrb[0].mxu0
    %v3004 = vadd.f32 0.0, %v3003
    %v3005 = vpop.f32.mrb[0].mxu0
    %3006 = vmatprep.mubr.f32.mxu0 0.0
    %3007 = vmatmul.mubr.f32.gmra.mrb[0].mxu0 %v2935
    %v3008 = vpop.f32.mrb[0].mxu0
    %v3009 = vadd.f32 0.0, %v3008
    %v3010 = vpop.f32.mrb[0].mxu0
    %3011 = vdwg.mxu0
    %v3028 = vsel %vm1205, %v1740, %v1733
    %v3029 = vsel %vm1207, %v1747, %v3028
    %v3030 = vsel %vm1209, %v1754, %v3029
    %v3031 = vsel %vm1211, %v1761, %v3030
    %v3032 = vsel %vm1213, %v1768, %v3031
    %v3033 = vsel %vm1215, %v1775, %v3032
    %v3034 = vsel %vm1217, %v1782, %v3033
    %v3035 = vsel %vm1205, %v1796, %v1789
    %v3036 = vsel %vm1207, %v1803, %v3035
    %v3037 = vsel %vm1209, %v1810, %v3036
    %v3038 = vsel %vm1211, %v1817, %v3037
    %v3039 = vsel %vm1213, %v1824, %v3038
    %v3040 = vsel %vm1215, %v1831, %v3039
    %v3041 = vsel %vm1217, %v1838, %v3040
    %v3042 = vsel %vm62, %v3034, 0
    %v3044 = vsel %vm62, %v3041, 0
    %3046 = vmatprep.subr.mxu0 0.0
    %3047 = vmatpush1.msra.mxu0 %v2895
    %3048 = vmatprep.subr.mxu0 0.0
    %3049 = vmatpush1.msra.mxu0 %v2896
    %3050 = vmatprep.subr.mxu0 0.0
    %3051 = vmatpush1.msra.mxu0 %v2897
    %3052 = vmatprep.subr.mxu0 0.0
    %3053 = vmatpush1.msra.mxu0 %v2898
    %3054 = vmatprep.subr.mxu0 0.0
    %3055 = vmatpush1.msra.mxu0 0.0
    %3056 = vmatprep.subr.mxu0 0.0
    %3057 = vmatpush1.msra.mxu0 0.0
    %3058 = vmatprep.subr.mxu0 0.0
    %3059 = vmatpush1.msra.mxu0 0.0
    %3060 = vmatprep.subr.mxu0 0.0
    %3061 = vmatpush1.msra.mxu0 0.0
    %3062 = vmatprep.subr.mxu0 0.0
    %3063 = vmatpush1.msra.mxu0 0.0
    %3064 = vmatprep.subr.mxu0 0.0
    %3065 = vmatpush1.msra.mxu0 0.0
    %3066 = vmatprep.subr.mxu0 0.0
    %3067 = vmatpush1.msra.mxu0 0.0
    %3068 = vmatprep.subr.mxu0 0.0
    %3069 = vmatpush1.msra.mxu0 0.0
    %3070 = vmatprep.subr.mxu0 0.0
    %3071 = vmatpush1.msra.mxu0 0.0
    %3072 = vmatprep.subr.mxu0 0.0
    %3073 = vmatpush1.msra.mxu0 0.0
    %3074 = vmatprep.subr.mxu0 0.0
    %3075 = vmatpush1.msra.mxu0 0.0
    %3076 = vmatprep.subr.mxu0 0.0
    %3077 = vmatpush1.msra.mxu0 0.0
    %3078 = vmatprep.subr.mxu0 0.0
    %3079 = vmatpush1.msra.mxu0 0.0
    %3080 = vmatprep.subr.mxu0 0.0
    %3081 = vmatpush1.msra.mxu0 0.0
    %3082 = vmatprep.subr.mxu0 0.0
    %3083 = vmatpush1.msra.mxu0 0.0
    %3084 = vmatprep.subr.mxu0 0.0
    %3085 = vmatpush1.msra.mxu0 0.0
    %3086 = vmatprep.subr.mxu0 0.0
    %3087 = vmatpush1.msra.mxu0 0.0
    %3088 = vmatprep.subr.mxu0 0.0
    %3089 = vmatpush1.msra.mxu0 0.0
    %3090 = vmatprep.subr.mxu0 0.0
    %3091 = vmatpush1.msra.mxu0 0.0
    %3092 = vmatprep.subr.mxu0 0.0
    %3093 = vmatpush1.msra.mxu0 0.0
    %3094 = vmatprep.subr.mxu0 0.0
    %3095 = vmatpush1.msra.mxu0 0.0
    %3096 = vmatprep.subr.mxu0 0.0
    %3097 = vmatpush1.msra.mxu0 0.0
    %3098 = vmatprep.subr.mxu0 0.0
    %3099 = vmatpush1.msra.mxu0 0.0
    %3100 = vmatprep.subr.mxu0 0.0
    %3101 = vmatpush1.msra.mxu0 0.0
    %3102 = vmatprep.subr.mxu0 0.0
    %3103 = vmatpush1.msra.mxu0 0.0
    %3104 = vmatprep.subr.mxu0 0.0
    %3105 = vmatpush1.msra.mxu0 0.0
    %3106 = vmatprep.subr.mxu0 0.0
    %3107 = vmatpush1.msra.mxu0 0.0
    %3108 = vmatprep.subr.mxu0 0.0
    %3109 = vmatpush1.msra.mxu0 0.0
    %3110 = vmatprep.mubr.f32.mxu0 0.0
    %3111 = vmatmul.mubr.f32.gmra.mrb[0].mxu0 %v3042
    %v3112 = vpop.f32.mrb[0].mxu0
    %v3113 = vadd.f32 %v3004, %v3112
    %v3114 = vpop.f32.mrb[0].mxu0
    %3115 = vmatprep.mubr.f32.mxu0 0.0
    %3116 = vmatmul.mubr.f32.gmra.mrb[0].mxu0 %v3044
    %v3117 = vpop.f32.mrb[0].mxu0
    %v3118 = vadd.f32 %v3009, %v3117
    %v3119 = vpop.f32.mrb[0].mxu0
    %3120 = vdwg.mxu0
    %v3121 = vld [vmem:[%s9] sm:$0xff]
    %v3122 = vld [vmem:[%s9 + $0x8] sm:$0xff]
    %v3123 = vld [vmem:[%s9 + $0x10] sm:$0xff]
    %v3124 = vld [vmem:[%s9 + $0x18] sm:$0xff]
    %v3125 = vld [vmem:[%s9 + $0x20] sm:$0xff]
    %v3126 = vld [vmem:[%s9 + $0x28] sm:$0xff]
    %v3127 = vld [vmem:[%s9 + $0x30] sm:$0xff]
    %v3128 = vld [vmem:[%s9 + $0x38] sm:$0xff]
    %3129 = vmatprep.subr.mxu0 0.0
    %3130 = vmatpush1.msra.mxu0 %v3125
    %3131 = vmatprep.subr.mxu0 0.0
    %3132 = vmatpush1.msra.mxu0 %v3126
    %3133 = vmatprep.subr.mxu0 0.0
    %3134 = vmatpush1.msra.mxu0 %v3127
    %3135 = vmatprep.subr.mxu0 0.0
    %3136 = vmatpush1.msra.mxu0 %v3128
    %3137 = vmatprep.subr.mxu0 0.0
    %3138 = vmatpush1.msra.mxu0 0.0
    %3139 = vmatprep.subr.mxu0 0.0
    %3140 = vmatpush1.msra.mxu0 0.0
    %3141 = vmatprep.subr.mxu0 0.0
    %3142 = vmatpush1.msra.mxu0 0.0
    %3143 = vmatprep.subr.mxu0 0.0
    %3144 = vmatpush1.msra.mxu0 0.0
    %3145 = vmatprep.subr.mxu0 0.0
    %3146 = vmatpush1.msra.mxu0 0.0
    %3147 = vmatprep.subr.mxu0 0.0
    %3148 = vmatpush1.msra.mxu0 0.0
    %3149 = vmatprep.subr.mxu0 0.0
    %3150 = vmatpush1.msra.mxu0 0.0
    %3151 = vmatprep.subr.mxu0 0.0
    %3152 = vmatpush1.msra.mxu0 0.0
    %3153 = vmatprep.subr.mxu0 0.0
    %3154 = vmatpush1.msra.mxu0 0.0
    %3155 = vmatprep.subr.mxu0 0.0
    %3156 = vmatpush1.msra.mxu0 0.0
    %3157 = vmatprep.subr.mxu0 0.0
    %3158 = vmatpush1.msra.mxu0 0.0
    %3159 = vmatprep.subr.mxu0 0.0
    %3160 = vmatpush1.msra.mxu0 0.0
    %3161 = vmatprep.subr.mxu0 0.0
    %3162 = vmatpush1.msra.mxu0 0.0
    %3163 = vmatprep.subr.mxu0 0.0
    %3164 = vmatpush1.msra.mxu0 0.0
    %3165 = vmatprep.subr.mxu0 0.0
    %3166 = vmatpush1.msra.mxu0 0.0
    %3167 = vmatprep.subr.mxu0 0.0
    %3168 = vmatpush1.msra.mxu0 0.0
    %3169 = vmatprep.subr.mxu0 0.0
    %3170 = vmatpush1.msra.mxu0 0.0
    %3171 = vmatprep.subr.mxu0 0.0
    %3172 = vmatpush1.msra.mxu0 0.0
    %3173 = vmatprep.subr.mxu0 0.0
    %3174 = vmatpush1.msra.mxu0 0.0
    %3175 = vmatprep.subr.mxu0 0.0
    %3176 = vmatpush1.msra.mxu0 0.0
    %3177 = vmatprep.subr.mxu0 0.0
    %3178 = vmatpush1.msra.mxu0 0.0
    %3179 = vmatprep.subr.mxu0 0.0
    %3180 = vmatpush1.msra.mxu0 0.0
    %3181 = vmatprep.subr.mxu0 0.0
    %3182 = vmatpush1.msra.mxu0 0.0
    %3183 = vmatprep.subr.mxu0 0.0
    %3184 = vmatpush1.msra.mxu0 0.0
    %3185 = vmatprep.subr.mxu0 0.0
    %3186 = vmatpush1.msra.mxu0 0.0
    %3187 = vmatprep.subr.mxu0 0.0
    %3188 = vmatpush1.msra.mxu0 0.0
    %3189 = vmatprep.subr.mxu0 0.0
    %3190 = vmatpush1.msra.mxu0 0.0
    %3191 = vmatprep.subr.mxu0 0.0
    %3192 = vmatpush1.msra.mxu0 0.0
    %3193 = vmatprep.mubr.f32.mxu0 0.0
    %3194 = vmatmul.mubr.f32.gmra.mrb[0].mxu0 %v261
    %v3195 = vpop.f32.mrb[0].mxu0
    %v3196 = vadd.f32 0.0, %v3195
    %v3197 = vpop.f32.mrb[0].mxu0
    %3198 = vmatprep.mubr.f32.mxu0 0.0
    %3199 = vmatmul.mubr.f32.gmra.mrb[0].mxu0 %v264
    %v3200 = vpop.f32.mrb[0].mxu0
    %v3201 = vadd.f32 0.0, %v3200
    %v3202 = vpop.f32.mrb[0].mxu0
    %3203 = vdwg.mxu0
    %v3205 = vsel %vm62, %v3113, 0
    %v3208 = vsel %vm62, %v3118, 0
    %3210 = vmatprep.subr.mxu0 0.0
    %3211 = vmatpush1.msra.mxu0 %v3121
    %3212 = vmatprep.subr.mxu0 0.0
    %3213 = vmatpush1.msra.mxu0 %v3122
    %3214 = vmatprep.subr.mxu0 0.0
    %3215 = vmatpush1.msra.mxu0 %v3123
    %3216 = vmatprep.subr.mxu0 0.0
    %3217 = vmatpush1.msra.mxu0 %v3124
    %3218 = vmatprep.subr.mxu0 0.0
    %3219 = vmatpush1.msra.mxu0 0.0
    %3220 = vmatprep.subr.mxu0 0.0
    %3221 = vmatpush1.msra.mxu0 0.0
    %3222 = vmatprep.subr.mxu0 0.0
    %3223 = vmatpush1.msra.mxu0 0.0
    %3224 = vmatprep.subr.mxu0 0.0
    %3225 = vmatpush1.msra.mxu0 0.0
    %3226 = vmatprep.subr.mxu0 0.0
    %3227 = vmatpush1.msra.mxu0 0.0
    %3228 = vmatprep.subr.mxu0 0.0
    %3229 = vmatpush1.msra.mxu0 0.0
    %3230 = vmatprep.subr.mxu0 0.0
    %3231 = vmatpush1.msra.mxu0 0.0
    %3232 = vmatprep.subr.mxu0 0.0
    %3233 = vmatpush1.msra.mxu0 0.0
    %3234 = vmatprep.subr.mxu0 0.0
    %3235 = vmatpush1.msra.mxu0 0.0
    %3236 = vmatprep.subr.mxu0 0.0
    %3237 = vmatpush1.msra.mxu0 0.0
    %3238 = vmatprep.subr.mxu0 0.0
    %3239 = vmatpush1.msra.mxu0 0.0
    %3240 = vmatprep.subr.mxu0 0.0
    %3241 = vmatpush1.msra.mxu0 0.0
    %3242 = vmatprep.subr.mxu0 0.0
    %3243 = vmatpush1.msra.mxu0 0.0
    %3244 = vmatprep.subr.mxu0 0.0
    %3245 = vmatpush1.msra.mxu0 0.0
    %3246 = vmatprep.subr.mxu0 0.0
    %3247 = vmatpush1.msra.mxu0 0.0
    %3248 = vmatprep.subr.mxu0 0.0
    %3249 = vmatpush1.msra.mxu0 0.0
    %3250 = vmatprep.subr.mxu0 0.0
    %3251 = vmatpush1.msra.mxu0 0.0
    %3252 = vmatprep.subr.mxu0 0.0
    %3253 = vmatpush1.msra.mxu0 0.0
    %3254 = vmatprep.subr.mxu0 0.0
    %3255 = vmatpush1.msra.mxu0 0.0
    %3256 = vmatprep.subr.mxu0 0.0
    %3257 = vmatpush1.msra.mxu0 0.0
    %3258 = vmatprep.subr.mxu0 0.0
    %3259 = vmatpush1.msra.mxu0 0.0
    %3260 = vmatprep.subr.mxu0 0.0
    %3261 = vmatpush1.msra.mxu0 0.0
    %3262 = vmatprep.subr.mxu0 0.0
    %3263 = vmatpush1.msra.mxu0 0.0
    %3264 = vmatprep.subr.mxu0 0.0
    %3265 = vmatpush1.msra.mxu0 0.0
    %3266 = vmatprep.subr.mxu0 0.0
    %3267 = vmatpush1.msra.mxu0 0.0
    %3268 = vmatprep.subr.mxu0 0.0
    %3269 = vmatpush1.msra.mxu0 0.0
    %3270 = vmatprep.subr.mxu0 0.0
    %3271 = vmatpush1.msra.mxu0 0.0
    %3272 = vmatprep.subr.mxu0 0.0
    %3273 = vmatpush1.msra.mxu0 0.0
    %3274 = vmatprep.mubr.f32.mxu0 0.0
    %3275 = vmatmul.mubr.f32.gmra.mrb[0].mxu0 %v3205
    %v3276 = vpop.f32.mrb[0].mxu0
    %v3277 = vadd.f32 %v3196, %v3276
    %v3278 = vpop.f32.mrb[0].mxu0
    %3279 = vmatprep.mubr.f32.mxu0 0.0
    %3280 = vmatmul.mubr.f32.gmra.mrb[0].mxu0 %v3208
    %v3281 = vpop.f32.mrb[0].mxu0
    %v3282 = vadd.f32 %v3201, %v3281
    %v3283 = vpop.f32.mrb[0].mxu0
    %3284 = vdwg.mxu0
    %v3285 = vtanh.pop %v3277
    %v3286 = vtanh.pop %v3282
    %3287 = vst.msk [vmem:[#allocation2] sm:$0xff] %vm62, %v3285
    %3288 = vst.msk [vmem:[#allocation2 + $0x8] sm:$0xff] %vm62, %v3286
    // Predicated region
    $region42: #{tpu_custom_call.1} parent=1 // pred_check
      _
    $region43: #{tpu_custom_call.1} parent=1 // pred_check_branch
      %3290 = sbr.rel (0) target = $region45
    $region44: #{tpu_custom_call.1} parent=1 // pred_region
      %s3292 = ssub.s32 256, 256
      %3293 = vsyncadd [#allocation3], %s3292
      %s3294 = sshll.u32 [#allocation2], 4
      %s3295 = int_to_ptr.vmem [resolvable:$true] %s3294
      %3300 = dma.vmem_to_hbm [thread:$0]  %s3295, 256, %s10, [#allocation3], 128, 128, 8
    $region45: #{tpu_custom_call.1} parent=1 // pred_fallthru
      _
    // Predicated region
    $region46: #{tpu_custom_call.1} parent=1 // pred_check
      _
    $region47: #{tpu_custom_call.1} parent=1 // pred_check_branch
      %3302 = sbr.rel (0) target = $region49
    $region48: #{tpu_custom_call.1} parent=1 // pred_region
      %3303 = dma.done [#allocation3], 256
    $region49: #{tpu_custom_call.1} parent=1 // pred_fallthru
      _
    %3304 = vsyncpa [#allocation3], 1

</llo_original>
